<compile_context>
chip_gen: v7x
topology: tpu7x:2x2x1
jax: 0.10.0
libtpu: 0.0.40
codegen_flags: <defaults>
</compile_context>

<pallas_src>
import math

import jax
import jax.numpy as jnp
from jax.experimental import pallas as pl
from jax.experimental.pallas import tpu as pltpu

LN_EPS = 1e-5
NEG_BIG = -1e30                       # finite additive mask value
SQRT_2_OVER_PI = math.sqrt(2.0 / math.pi)
F32 = jnp.float32
BF16 = jnp.bfloat16
REF_PREC = jax.lax.Precision.HIGHEST


# ----------------------------- shared math helpers -----------------------------
def _layernorm(x, g, b):
    # matches torch.nn.LayerNorm (biased variance, eps inside sqrt)
    mu = jnp.mean(x, axis=-1, keepdims=True)
    var = jnp.mean(jnp.square(x - mu), axis=-1, keepdims=True)
    return (x - mu) * jax.lax.rsqrt(var + LN_EPS) * g + b


def _gelu_tanh(x):
    # tanh-GELU (one EUP tanh); numerics-visible vs torch's exact-erf nn.GELU(),
    # validated against the exact-erf reference within the script's tolerance.
    return 0.5 * x * (1.0 + jnp.tanh(SQRT_2_OVER_PI * (x + 0.044715 * (x * x * x))))


# --------------------------------- the kernel ----------------------------------
def make_transformer_kernel(n_head, T, bt):
    H = n_head

    def kernel(idx_ref, wte_w_ref, wte_b_ref, wpe_ref,
               lnf_g_ref, lnf_b_ref, lm_w_ref,
               ln1_g_ref, ln1_b_ref, wqkv_ref, bqkv_ref, wproj_ref, bproj_ref,
               ln2_g_ref, ln2_b_ref, wfc_ref, bfc_ref, wcp_ref, bcp_ref,
               out_ref, x_ref, mask_ref):
        l = pl.program_id(1)
        n_layer = pl.num_programs(1)
        C = wqkv_ref.shape[1]
        hd = C // H
        scale = 1.0 / math.sqrt(hd)
        N = bt * T

        # ---- first layer step: embeddings into the residual slab + causal bias ----
        @pl.when(l == 0)
        def _():
            idx2 = idx_ref[...].reshape(bt, T)                         # (bt, T)
            wte_w = wte_w_ref[...].reshape(1, 1, C)
            wte_b = wte_b_ref[...].reshape(1, 1, C)
            tok = idx2[:, :, None] * wte_w + wte_b                     # (bt, T, C)
            x0 = tok + wpe_ref[0:T, :][None, :, :]
            x_ref[...] = x0.reshape(N, C)
            # additive causal-mask bias, built once per batch tile and reused by
            # every layer (hoists the per-step iota + compare + select chain)
            row = jax.lax.broadcasted_iota(jnp.int32, (T, T), 0)
            col = jax.lax.broadcasted_iota(jnp.int32, (T, T), 1)
            mask_ref[...] = jnp.where(col <= row, 0.0, NEG_BIG).astype(F32)

        x = x_ref[...]                                                 # (N, C) f32 residual slab

        # ---- causal self-attention: fused QKV matmul (bf16 operands, f32 acc) ----
        h1 = _layernorm(x, ln1_g_ref[0], ln1_b_ref[0])
        qkv = (jnp.dot(h1.astype(BF16), wqkv_ref[0],
                       preferred_element_type=F32) + bqkv_ref[0])      # (N, 3C) f32
        qkv3 = qkv.reshape(bt, T, 3 * C)

        def head_stack(base):                                          # -> (H*bt, T, hd)
            return jnp.concatenate(
                [qkv3[:, :, base + hh * hd: base + (hh + 1) * hd] for hh in range(H)],
                axis=0)

        qz = head_stack(0).astype(BF16)
        kz = head_stack(C).astype(BF16)
        vz = head_stack(2 * C).astype(BF16)

        att = jnp.einsum('zqd,zkd->zqk', qz, kz,
                         preferred_element_type=F32) * scale           # (H*bt, T, T) f32
        att = att + mask_ref[...][None, :, :]
        att = att - jnp.max(att, axis=-1, keepdims=True)
        e = jnp.exp(att)
        p = e * pl.reciprocal(jnp.sum(e, axis=-1, keepdims=True), approx=True)
        yz = jnp.einsum('zqk,zkd->zqd', p.astype(BF16), vz,
                        preferred_element_type=F32)                    # (H*bt, T, hd) f32

        # output projection folded per head: attn_out = sum_h y_h @ Wproj[h]
        # (no per-head masked lane-scatter, no (N, C) scratch store + reload)
        attn_out = None
        for hh in range(H):
            y_h = yz[hh * bt:(hh + 1) * bt].reshape(N, hd).astype(BF16)
            term = jnp.dot(y_h, wproj_ref[0, hh], preferred_element_type=F32)
            attn_out = term if attn_out is None else attn_out + term
        x = x + attn_out + bproj_ref[0]

        # ---- MLP (element-wise path kept f32; matmul operands bf16) ----
        h2 = _layernorm(x, ln2_g_ref[0], ln2_b_ref[0])
        hfc = (jnp.dot(h2.astype(BF16), wfc_ref[0],
                       preferred_element_type=F32) + bfc_ref[0])       # (N, 4C)
        hfc = _gelu_tanh(hfc)
        mo = (jnp.dot(hfc.astype(BF16), wcp_ref[0],
                      preferred_element_type=F32) + bcp_ref[0])
        x = x + mo
        x_ref[...] = x

        # ---- final LayerNorm + lm_head (Linear(C, 1, bias=False)): last step only ----
        @pl.when(l == n_layer - 1)
        def _():
            xf = _layernorm(x, lnf_g_ref[...], lnf_b_ref[...])          # (N, C)
            logits = jnp.sum(xf.reshape(bt, T, C) * lm_w_ref[...][None, :, :],
                             axis=-1)                                   # (bt, T)
            out_ref[...] = logits[:, None, :]

    return kernel


# --------------------------------- the wrapper ----------------------------------
def transformer_forward(idx, params, n_head, *, batch_tile=None):
    B, T = idx.shape
    L, C, threeC = params['wqkv'].shape
    assert threeC == 3 * C and C % n_head == 0
    hd = C // n_head
    C4 = params['wfc'].shape[2]
    block_size = params['wpe'].shape[0]
    assert T <= block_size

    if batch_tile is None:
        # >= 2 batch tiles so the "parallel" batch axis shards across both v7x
        # TensorCores.  For large B, keep bt*T >= ~256-700 rows (per-generation
        # compute-bound threshold for streamed bf16 weights) subject to the
        # activation VMEM cap below.
        bt = B // 2 if (B >= 2 and B % 2 == 0) else B
        while bt > 1 and bt % 2 == 0 and 13 * bt * T * C * 4 > (16 << 20):
            bt //= 2
    else:
        bt = min(batch_tile, B)
    assert B % bt == 0
    nb = B // bt
    N = bt * T

    # per-layer vectors are laid out as (L, 1, X) so every BlockSpec keeps its
    # last two dims equal to the full array dims (TPU (8,128) block rule).
    r3 = lambda a: a.reshape(a.shape[0], 1, a.shape[1])
    idx3 = idx.reshape(B, 1, T)

    # streamed matmul weights -> bf16 (1 MXU pass, half DMA / VMEM); biases,
    # layernorm params and embeddings stay f32 (element-wise path).
    wproj4 = params['wproj'].reshape(L, n_head, hd, C).astype(BF16)
    args = (
        idx3,
        params['wte_w'], params['wte_b'], params['wpe'],
        params['lnf_g'], params['lnf_b'], params['lm_w'],
        r3(params['ln1_g']), r3(params['ln1_b']),
        params['wqkv'].astype(BF16), r3(params['bqkv']),
        wproj4, r3(params['bproj']),
        r3(params['ln2_g']), r3(params['ln2_b']),
        params['wfc'].astype(BF16), r3(params['bfc']),
        params['wcp'].astype(BF16), r3(params['bcp']),
    )

    def layer_spec(shape):   # streamed per-layer block (double-buffered by Pallas)
        return pl.BlockSpec((1,) + shape, lambda b, l: (l,) + (0,) * len(shape))

    def fixed_spec(shape):   # resident across the whole grid
        return pl.BlockSpec(shape, lambda b, l: (0,) * len(shape))

    batch_spec = pl.BlockSpec((bt, 1, T), lambda b, l: (b, 0, 0))

    in_specs = [
        batch_spec,
        fixed_spec((1, C)), fixed_spec((1, C)), fixed_spec((block_size, C)),
        fixed_spec((1, C)), fixed_spec((1, C)), fixed_spec((1, C)),
        layer_spec((1, C)), layer_spec((1, C)),
        layer_spec((C, 3 * C)), layer_spec((1, 3 * C)),
        layer_spec((n_head, hd, C)), layer_spec((1, C)),
        layer_spec((1, C)), layer_spec((1, C)),
        layer_spec((C, C4)), layer_spec((1, C4)),
        layer_spec((C4, C)), layer_spec((1, C)),
    ]

    # VMEM budget: 2x double-buffered streamed per-layer weights (bf16) +
    # resident params + scratch + activation temporaries, including the
    # (H, T, T) attention scores/probs, the q/k/v head stacks and the (N, 4C)
    # MLP hidden (x1.5 for the bf16 operand copies).
    per_layer = (2 * (C * 3 * C + C * C + C * C4 + C4 * C)          # bf16 matmul weights
                 + 4 * (3 * C + C + C4 + C + 4 * C))                # f32 biases + ln params
    resident = 4 * (6 * C + block_size * C + 2 * N)                 # embeddings / lm_head / io
    scratch = 4 * (N * C + T * T)                                   # residual slab + mask
    act = 4 * N * (C + 3 * C + 3 * C + C4 + C) + 4 * bt * n_head * T * T * 2
    est = 2 * per_layer + resident + scratch + int(1.5 * act)

    try:
        info = pltpu.get_tpu_info()
        vmem_cap = int(getattr(info, "vmem_capacity_bytes", 64 << 20))
    except Exception:
        vmem_cap = 64 << 20          # v7x per-TensorCore floor
    vmem_limit = int(min(max(int(1.25 * est) + (4 << 20), 32 << 20),
                         vmem_cap - (8 << 20)))

    out3 = pl.pallas_call(
        make_transformer_kernel(n_head, T, bt),
        out_shape=jax.ShapeDtypeStruct((B, 1, T), jnp.float32),
        grid_spec=pltpu.PrefetchScalarGridSpec(
            num_scalar_prefetch=0,
            grid=(nb, L),
            in_specs=in_specs,
            out_specs=pl.BlockSpec((bt, 1, T), lambda b, l: (b, 0, 0)),
            scratch_shapes=[pltpu.VMEM((N, C), jnp.float32),    # residual slab
                            pltpu.VMEM((T, T), jnp.float32)],   # additive causal bias
        ),
        compiler_params=pltpu.CompilerParams(
            dimension_semantics=("parallel", "arbitrary"),
            vmem_limit_bytes=vmem_limit),
    )(*args)
    return out3.reshape(B, T)


# ------------------------------- pure-JAX reference -----------------------------
def ref_forward(idx, p, n_head):
    B, T = idx.shape
    L, C, _ = p['wqkv'].shape
    H = n_head
    hd = C // H
    x = (idx[:, :, None] * p['wte_w'][0][None, None, :]
         + p['wte_b'][0][None, None, :] + p['wpe'][:T][None, :, :])
    causal = jnp.tril(jnp.ones((T, T), dtype=bool))
    for l in range(L):
        h = _layernorm(x, p['ln1_g'][l], p['ln1_b'][l])
        qkv = jnp.einsum('btc,cd->btd', h, p['wqkv'][l], precision=REF_PREC) + p['bqkv'][l]
        q, k, v = jnp.split(qkv, 3, axis=-1)
        q = q.reshape(B, T, H, hd).transpose(0, 2, 1, 3)
        k = k.reshape(B, T, H, hd).transpose(0, 2, 1, 3)
        v = v.reshape(B, T, H, hd).transpose(0, 2, 1, 3)
        att = jnp.einsum('bhtd,bhsd->bhts', q, k, precision=REF_PREC) / math.sqrt(hd)
        att = jnp.where(causal[None, None], att, -jnp.inf)
        att = jax.nn.softmax(att, axis=-1)
        y = jnp.einsum('bhts,bhsd->bhtd', att, v, precision=REF_PREC)
        y = y.transpose(0, 2, 1, 3).reshape(B, T, C)
        x = x + jnp.einsum('btc,cd->btd', y, p['wproj'][l], precision=REF_PREC) + p['bproj'][l]
        h = _layernorm(x, p['ln2_g'][l], p['ln2_b'][l])
        hfc = jax.nn.gelu(jnp.einsum('btc,cd->btd', h, p['wfc'][l], precision=REF_PREC)
                          + p['bfc'][l], approximate=False)
        x = x + jnp.einsum('btd,dc->btc', hfc, p['wcp'][l], precision=REF_PREC) + p['bcp'][l]
    x = _layernorm(x, p['lnf_g'][0], p['lnf_b'][0])
    return jnp.sum(x * p['lm_w'][0][None, None, :], axis=-1)


# --------------------------------- param init -----------------------------------
def init_params(key, *, n_layer, n_embd, block_size):
    C, L = n_embd, n_layer
    ks = jax.random.split(key, 16)
    w = lambda k, shape, std=0.02: (std * jax.random.normal(k, shape)).astype(jnp.float32)
    return dict(
        wte_w=w(ks[0], (1, C)), wte_b=w(ks[1], (1, C)),
        wpe=w(ks[2], (block_size, C)),
        ln1_g=jnp.ones((L, C), jnp.float32), ln1_b=jnp.zeros((L, C), jnp.float32),
        wqkv=w(ks[3], (L, C, 3 * C)), bqkv=w(ks[4], (L, 3 * C)),
        wproj=w(ks[5], (L, C, C)), bproj=w(ks[6], (L, C)),
        ln2_g=jnp.ones((L, C), jnp.float32), ln2_b=jnp.zeros((L, C), jnp.float32),
        wfc=w(ks[7], (L, C, 4 * C)), bfc=w(ks[8], (L, 4 * C)),
        wcp=w(ks[9], (L, 4 * C, C)), bcp=w(ks[10], (L, C)),
        lnf_g=jnp.ones((1, C), jnp.float32), lnf_b=jnp.zeros((1, C), jnp.float32),
        lm_w=w(ks[11], (1, C)),
    )


if __name__ == "__main__":
    # config: vocab_size=1 (forward applies Linear(vocab_size, C) to idx[..., None])
    B, T = 2, 8
    block_size, n_embd, n_head, n_layer = 8, 32, 4, 2

    key = jax.random.PRNGKey(0)
    k_idx, k_par = jax.random.split(key)
    idx = jax.random.normal(k_idx, (B, T), dtype=jnp.float32)   # scalar "tokens"
    params = init_params(k_par, n_layer=n_layer, n_embd=n_embd, block_size=block_size)

    logits = jax.block_until_ready(transformer_forward(idx, params, n_head))   # (B, T)
    expected = jax.block_until_ready(ref_forward(idx, params, n_head))

    assert logits.shape == (B, T)
    err = float(jnp.max(jnp.abs(logits - expected)))
    # tolerance reflects native-bf16 matmul operands (and tanh- vs erf-GELU)
    # against the f32 / Precision.HIGHEST reference; logits are O(0.1).
    assert jnp.allclose(logits, expected, rtol=2e-2, atol=1e-2), (
        f"mismatch: max abs err {err}")
    print("KERNEL_OK")
</pallas_src>

<mosaic_0001>
module attributes {stable_mosaic.version = 11 : i64} {
  func.func @kernel(%arg0: i32, %arg1: i32, %arg2: memref<1x1x8xf32, #tpu.memory_space<vmem>>, %arg3: memref<1x32xf32, #tpu.memory_space<vmem>>, %arg4: memref<1x32xf32, #tpu.memory_space<vmem>>, %arg5: memref<8x32xf32, #tpu.memory_space<vmem>>, %arg6: memref<1x32xf32, #tpu.memory_space<vmem>>, %arg7: memref<1x32xf32, #tpu.memory_space<vmem>>, %arg8: memref<1x32xf32, #tpu.memory_space<vmem>>, %arg9: memref<1x1x32xf32, #tpu.memory_space<vmem>>, %arg10: memref<1x1x32xf32, #tpu.memory_space<vmem>>, %arg11: memref<1x32x96xbf16, #tpu.memory_space<vmem>>, %arg12: memref<1x1x96xf32, #tpu.memory_space<vmem>>, %arg13: memref<1x4x8x32xbf16, #tpu.memory_space<vmem>>, %arg14: memref<1x1x32xf32, #tpu.memory_space<vmem>>, %arg15: memref<1x1x32xf32, #tpu.memory_space<vmem>>, %arg16: memref<1x1x32xf32, #tpu.memory_space<vmem>>, %arg17: memref<1x32x128xbf16, #tpu.memory_space<vmem>>, %arg18: memref<1x1x128xf32, #tpu.memory_space<vmem>>, %arg19: memref<1x128x32xbf16, #tpu.memory_space<vmem>>, %arg20: memref<1x1x32xf32, #tpu.memory_space<vmem>>, %arg21: memref<1x1x8xf32, #tpu.memory_space<vmem>>, %arg22: memref<8x32xf32, #tpu.memory_space<vmem>>, %arg23: memref<8x8xf32, #tpu.memory_space<vmem>>) attributes {dimension_semantics = [#tpu.dimension_semantics<parallel>, #tpu.dimension_semantics<arbitrary>], iteration_bounds = array<i64: 2, 2>, scalar_prefetch = 0 : i64, scratch_operands = 2 : i64, tpu.core_type = #tpu.core_type<tc>, window_params = [{transform_indices = @transform_0, window_bounds = array<i64: 1, 1, 8>}, {pipeline_mode = #tpu.pipeline_mode<synchronous>, transform_indices = @transform_1, window_bounds = array<i64: 1, 32>}, {pipeline_mode = #tpu.pipeline_mode<synchronous>, transform_indices = @transform_2, window_bounds = array<i64: 1, 32>}, {pipeline_mode = #tpu.pipeline_mode<synchronous>, transform_indices = @transform_3, window_bounds = array<i64: 8, 32>}, {pipeline_mode = #tpu.pipeline_mode<synchronous>, transform_indices = @transform_4, window_bounds = array<i64: 1, 32>}, {pipeline_mode = #tpu.pipeline_mode<synchronous>, transform_indices = @transform_5, window_bounds = array<i64: 1, 32>}, {pipeline_mode = #tpu.pipeline_mode<synchronous>, transform_indices = @transform_6, window_bounds = array<i64: 1, 32>}, {transform_indices = @transform_7, window_bounds = array<i64: 1, 1, 32>}, {transform_indices = @transform_8, window_bounds = array<i64: 1, 1, 32>}, {transform_indices = @transform_9, window_bounds = array<i64: 1, 32, 96>}, {transform_indices = @transform_10, window_bounds = array<i64: 1, 1, 96>}, {transform_indices = @transform_11, window_bounds = array<i64: 1, 4, 8, 32>}, {transform_indices = @transform_12, window_bounds = array<i64: 1, 1, 32>}, {transform_indices = @transform_13, window_bounds = array<i64: 1, 1, 32>}, {transform_indices = @transform_14, window_bounds = array<i64: 1, 1, 32>}, {transform_indices = @transform_15, window_bounds = array<i64: 1, 32, 128>}, {transform_indices = @transform_16, window_bounds = array<i64: 1, 1, 128>}, {transform_indices = @transform_17, window_bounds = array<i64: 1, 128, 32>}, {transform_indices = @transform_18, window_bounds = array<i64: 1, 1, 32>}, {transform_indices = @transform_19, window_bounds = array<i64: 1, 1, 8>}]} {
    %c0_i32 = arith.constant 0 : i32
    %0 = arith.cmpi eq, %arg1, %c0_i32 : i32
    %1 = arith.extui %0 : i1 to i32
    %c0_i32_0 = arith.constant 0 : i32
    %2 = arith.cmpi ne, %1, %c0_i32_0 : i32
    scf.if %2 {
      %c0_78 = arith.constant 0 : index
      %c0_79 = arith.constant 0 : index
      %c0_80 = arith.constant 0 : index
      %168 = vector.load %arg2[%c0_78, %c0_79, %c0_80] : memref<1x1x8xf32, #tpu.memory_space<vmem>>, vector<1x1x8xf32>
      %169 = vector.shape_cast %168 : vector<1x1x8xf32> to vector<1x8xf32>
      %c0_81 = arith.constant 0 : index
      %c0_82 = arith.constant 0 : index
      %170 = vector.load %arg3[%c0_81, %c0_82] : memref<1x32xf32, #tpu.memory_space<vmem>>, vector<1x32xf32>
      %171 = vector.shape_cast %170 : vector<1x32xf32> to vector<1x1x32xf32>
      %c0_83 = arith.constant 0 : index
      %c0_84 = arith.constant 0 : index
      %172 = vector.load %arg4[%c0_83, %c0_84] : memref<1x32xf32, #tpu.memory_space<vmem>>, vector<1x32xf32>
      %173 = vector.shape_cast %172 : vector<1x32xf32> to vector<1x1x32xf32>
      %174 = vector.shape_cast %169 : vector<1x8xf32> to vector<1x8x1xf32>
      %175 = vector.broadcast %174 : vector<1x8x1xf32> to vector<1x8x32xf32>
      %176 = vector.broadcast %171 : vector<1x1x32xf32> to vector<1x8x32xf32>
      %177 = arith.mulf %175, %176 : vector<1x8x32xf32>
      %178 = vector.broadcast %173 : vector<1x1x32xf32> to vector<1x8x32xf32>
      %179 = arith.addf %177, %178 : vector<1x8x32xf32>
      %c0_85 = arith.constant 0 : index
      %c0_86 = arith.constant 0 : index
      %180 = vector.load %arg5[%c0_85, %c0_86] : memref<8x32xf32, #tpu.memory_space<vmem>>, vector<8x32xf32>
      %181 = vector.shape_cast %180 : vector<8x32xf32> to vector<1x8x32xf32>
      %182 = arith.addf %179, %181 : vector<1x8x32xf32>
      %183 = vector.shape_cast %182 : vector<1x8x32xf32> to vector<8x32xf32>
      %c0_87 = arith.constant 0 : index
      %c0_88 = arith.constant 0 : index
      %184 = vector.load %arg22[%c0_87, %c0_88] : memref<8x32xf32, #tpu.memory_space<vmem>>, vector<8x32xf32>
      tpu.vector_store %arg22[%c0_87, %c0_88], %183 {strides = array<i32>} : memref<8x32xf32, #tpu.memory_space<vmem>>, vector<8x32xf32>,
      %185 = tpu.iota {dimensions = array<i32: 0>} : vector<8x8xi32>
      %186 = tpu.iota {dimensions = array<i32: 1>} : vector<8x8xi32>
      %187 = arith.cmpi sle, %186, %185 : vector<8x8xi32>
      %cst_89 = arith.constant 0.000000e+00 : f32
      %cst_90 = arith.constant -1.000000e+30 : f32
      %188 = vector.broadcast %cst_89 : f32 to vector<8x8xf32>
      %189 = vector.broadcast %cst_90 : f32 to vector<8x8xf32>
      %190 = arith.select %187, %188, %189 : vector<8x8xi1>, vector<8x8xf32>
      %c0_91 = arith.constant 0 : index
      %c0_92 = arith.constant 0 : index
      %191 = vector.load %arg23[%c0_91, %c0_92] : memref<8x8xf32, #tpu.memory_space<vmem>>, vector<8x8xf32>
      tpu.vector_store %arg23[%c0_91, %c0_92], %190 {strides = array<i32>} : memref<8x8xf32, #tpu.memory_space<vmem>>, vector<8x8xf32>,
    } else {
    }
    %c0 = arith.constant 0 : index
    %c0_1 = arith.constant 0 : index
    %3 = vector.load %arg22[%c0, %c0_1] : memref<8x32xf32, #tpu.memory_space<vmem>>, vector<8x32xf32>
    %c0_2 = arith.constant 0 : index
    %c0_3 = arith.constant 0 : index
    %c0_4 = arith.constant 0 : index
    %4 = vector.load %arg9[%c0_2, %c0_3, %c0_4] : memref<1x1x32xf32, #tpu.memory_space<vmem>>, vector<1x1x32xf32>
    %5 = vector.shape_cast %4 : vector<1x1x32xf32> to vector<1x32xf32>
    %c0_5 = arith.constant 0 : index
    %c0_6 = arith.constant 0 : index
    %c0_7 = arith.constant 0 : index
    %6 = vector.load %arg10[%c0_5, %c0_6, %c0_7] : memref<1x1x32xf32, #tpu.memory_space<vmem>>, vector<1x1x32xf32>
    %7 = vector.shape_cast %6 : vector<1x1x32xf32> to vector<1x32xf32>
    %cst = arith.constant dense<0.000000e+00> : vector<8xf32>
    %8 = vector.multi_reduction <add>, %3, %cst [1] : vector<8x32xf32> to vector<8xf32>
    %9 = vector.shape_cast %8 : vector<8xf32> to vector<8x1xf32>
    %cst_8 = arith.constant 3.200000e+01 : f32
    %10 = vector.broadcast %cst_8 : f32 to vector<8x1xf32>
    %11 = arith.divf %9, %10 : vector<8x1xf32>
    %12 = vector.broadcast %11 : vector<8x1xf32> to vector<8x32xf32>
    %13 = arith.subf %3, %12 : vector<8x32xf32>
    %14 = arith.mulf %13, %13 : vector<8x32xf32>
    %cst_9 = arith.constant dense<0.000000e+00> : vector<8xf32>
    %15 = vector.multi_reduction <add>, %14, %cst_9 [1] : vector<8x32xf32> to vector<8xf32>
    %16 = vector.shape_cast %15 : vector<8xf32> to vector<8x1xf32>
    %cst_10 = arith.constant 3.200000e+01 : f32
    %17 = vector.broadcast %cst_10 : f32 to vector<8x1xf32>
    %18 = arith.divf %16, %17 : vector<8x1xf32>
    %19 = vector.broadcast %11 : vector<8x1xf32> to vector<8x32xf32>
    %20 = arith.subf %3, %19 : vector<8x32xf32>
    %cst_11 = arith.constant 9.99999974E-6 : f32
    %21 = vector.broadcast %cst_11 : f32 to vector<8x1xf32>
    %22 = arith.addf %18, %21 : vector<8x1xf32>
    %23 = math.rsqrt %22 : vector<8x1xf32>
    %24 = vector.broadcast %23 : vector<8x1xf32> to vector<8x32xf32>
    %25 = arith.mulf %20, %24 : vector<8x32xf32>
    %26 = vector.broadcast %5 : vector<1x32xf32> to vector<8x32xf32>
    %27 = arith.mulf %25, %26 : vector<8x32xf32>
    %28 = vector.broadcast %7 : vector<1x32xf32> to vector<8x32xf32>
    %29 = arith.addf %27, %28 : vector<8x32xf32>
    %30 = arith.truncf %29 : vector<8x32xf32> to vector<8x32xbf16>
    %c0_12 = arith.constant 0 : index
    %c0_13 = arith.constant 0 : index
    %c0_14 = arith.constant 0 : index
    %31 = vector.load %arg11[%c0_12, %c0_13, %c0_14] : memref<1x32x96xbf16, #tpu.memory_space<vmem>>, vector<1x32x96xbf16>
    %32 = vector.shape_cast %31 : vector<1x32x96xbf16> to vector<32x96xbf16>
    %cst_15 = arith.constant dense<0.000000e+00> : vector<8x96xf32>
    %33 = tpu.matmul %30, %32, %cst_15 {dimension_numbers = #tpu.dot_dimension_numbers<[1], [0], [0], [1], [0, 0, 1, 1], [], []>} : vector<8x32xbf16>, vector<32x96xbf16>, vector<8x96xf32> -> vector<8x96xf32>
    %c0_16 = arith.constant 0 : index
    %c0_17 = arith.constant 0 : index
    %c0_18 = arith.constant 0 : index
    %34 = vector.load %arg12[%c0_16, %c0_17, %c0_18] : memref<1x1x96xf32, #tpu.memory_space<vmem>>, vector<1x1x96xf32>
    %35 = vector.shape_cast %34 : vector<1x1x96xf32> to vector<1x96xf32>
    %36 = vector.broadcast %35 : vector<1x96xf32> to vector<8x96xf32>
    %37 = arith.addf %33, %36 : vector<8x96xf32>
    %38 = vector.shape_cast %37 : vector<8x96xf32> to vector<1x8x96xf32>
    %39 = vector.extract_strided_slice %38 {offsets = [0, 0, 0], sizes = [1, 8, 8], strides = [1, 1, 1]} : vector<1x8x96xf32> to vector<1x8x8xf32>
    %40 = vector.extract_strided_slice %38 {offsets = [0, 0, 8], sizes = [1, 8, 8], strides = [1, 1, 1]} : vector<1x8x96xf32> to vector<1x8x8xf32>
    %41 = vector.extract_strided_slice %38 {offsets = [0, 0, 16], sizes = [1, 8, 8], strides = [1, 1, 1]} : vector<1x8x96xf32> to vector<1x8x8xf32>
    %42 = vector.extract_strided_slice %38 {offsets = [0, 0, 24], sizes = [1, 8, 8], strides = [1, 1, 1]} : vector<1x8x96xf32> to vector<1x8x8xf32>
    %43 = tpu.concatenate %39, %40, %41, %42 in 0 : vector<1x8x8xf32>, vector<1x8x8xf32>, vector<1x8x8xf32>, vector<1x8x8xf32> -> vector<4x8x8xf32>
    %44 = arith.truncf %43 : vector<4x8x8xf32> to vector<4x8x8xbf16>
    %45 = vector.extract_strided_slice %38 {offsets = [0, 0, 32], sizes = [1, 8, 8], strides = [1, 1, 1]} : vector<1x8x96xf32> to vector<1x8x8xf32>
    %46 = vector.extract_strided_slice %38 {offsets = [0, 0, 40], sizes = [1, 8, 8], strides = [1, 1, 1]} : vector<1x8x96xf32> to vector<1x8x8xf32>
    %47 = vector.extract_strided_slice %38 {offsets = [0, 0, 48], sizes = [1, 8, 8], strides = [1, 1, 1]} : vector<1x8x96xf32> to vector<1x8x8xf32>
    %48 = vector.extract_strided_slice %38 {offsets = [0, 0, 56], sizes = [1, 8, 8], strides = [1, 1, 1]} : vector<1x8x96xf32> to vector<1x8x8xf32>
    %49 = tpu.concatenate %45, %46, %47, %48 in 0 : vector<1x8x8xf32>, vector<1x8x8xf32>, vector<1x8x8xf32>, vector<1x8x8xf32> -> vector<4x8x8xf32>
    %50 = arith.truncf %49 : vector<4x8x8xf32> to vector<4x8x8xbf16>
    %51 = vector.extract_strided_slice %38 {offsets = [0, 0, 64], sizes = [1, 8, 8], strides = [1, 1, 1]} : vector<1x8x96xf32> to vector<1x8x8xf32>
    %52 = vector.extract_strided_slice %38 {offsets = [0, 0, 72], sizes = [1, 8, 8], strides = [1, 1, 1]} : vector<1x8x96xf32> to vector<1x8x8xf32>
    %53 = vector.extract_strided_slice %38 {offsets = [0, 0, 80], sizes = [1, 8, 8], strides = [1, 1, 1]} : vector<1x8x96xf32> to vector<1x8x8xf32>
    %54 = vector.extract_strided_slice %38 {offsets = [0, 0, 88], sizes = [1, 8, 8], strides = [1, 1, 1]} : vector<1x8x96xf32> to vector<1x8x8xf32>
    %55 = tpu.concatenate %51, %52, %53, %54 in 0 : vector<1x8x8xf32>, vector<1x8x8xf32>, vector<1x8x8xf32>, vector<1x8x8xf32> -> vector<4x8x8xf32>
    %56 = arith.truncf %55 : vector<4x8x8xf32> to vector<4x8x8xbf16>
    "tpu.trace_start"() <{level = 10 : i32, message = "zqd,zkd->zqk"}> : () -> ()
    %cst_19 = arith.constant dense<0.000000e+00> : vector<4x8x8xf32>
    %57 = tpu.matmul %44, %50, %cst_19 {dimension_numbers = #tpu.dot_dimension_numbers<[2], [2], [1], [1], [0, 0, 0, 1, 1, 1], [0], [0]>} : vector<4x8x8xbf16>, vector<4x8x8xbf16>, vector<4x8x8xf32> -> vector<4x8x8xf32>
    "tpu.trace_stop"() : () -> ()
    %cst_20 = arith.constant 0.353553385 : f32
    %58 = vector.broadcast %cst_20 : f32 to vector<4x8x8xf32>
    %59 = arith.mulf %57, %58 : vector<4x8x8xf32>
    %c0_21 = arith.constant 0 : index
    %c0_22 = arith.constant 0 : index
    %60 = vector.load %arg23[%c0_21, %c0_22] : memref<8x8xf32, #tpu.memory_space<vmem>>, vector<8x8xf32>
    %61 = vector.shape_cast %60 : vector<8x8xf32> to vector<1x8x8xf32>
    %62 = vector.broadcast %61 : vector<1x8x8xf32> to vector<4x8x8xf32>
    %63 = arith.addf %59, %62 : vector<4x8x8xf32>
    %cst_23 = arith.constant dense<0xFF800000> : vector<4x8xf32>
    %64 = vector.multi_reduction <maximumf>, %63, %cst_23 [2] : vector<4x8x8xf32> to vector<4x8xf32>
    %65 = vector.shape_cast %64 : vector<4x8xf32> to vector<4x8x1xf32>
    %66 = vector.broadcast %65 : vector<4x8x1xf32> to vector<4x8x8xf32>
    %67 = arith.subf %63, %66 : vector<4x8x8xf32>
    %68 = math.exp %67 : vector<4x8x8xf32>
    %cst_24 = arith.constant dense<0.000000e+00> : vector<4x8xf32>
    %69 = vector.multi_reduction <add>, %68, %cst_24 [2] : vector<4x8x8xf32> to vector<4x8xf32>
    %70 = vector.shape_cast %69 : vector<4x8xf32> to vector<4x8x1xf32>
    %71 = tpu.reciprocal %70 {approx = true} : vector<4x8x1xf32> -> vector<4x8x1xf32>
    %72 = vector.broadcast %71 : vector<4x8x1xf32> to vector<4x8x8xf32>
    %73 = arith.mulf %68, %72 : vector<4x8x8xf32>
    %74 = arith.truncf %73 : vector<4x8x8xf32> to vector<4x8x8xbf16>
    "tpu.trace_start"() <{level = 10 : i32, message = "zqk,zkd->zqd"}> : () -> ()
    %cst_25 = arith.constant dense<0.000000e+00> : vector<4x8x8xf32>
    %75 = tpu.matmul %74, %56, %cst_25 {dimension_numbers = #tpu.dot_dimension_numbers<[2], [1], [1], [2], [0, 0, 0, 1, 1, 2], [0], [0]>} : vector<4x8x8xbf16>, vector<4x8x8xbf16>, vector<4x8x8xf32> -> vector<4x8x8xf32>
    "tpu.trace_stop"() : () -> ()
    %76 = vector.extract_strided_slice %75 {offsets = [0, 0, 0], sizes = [1, 8, 8], strides = [1, 1, 1]} : vector<4x8x8xf32> to vector<1x8x8xf32>
    %77 = vector.shape_cast %76 : vector<1x8x8xf32> to vector<8x8xf32>
    %78 = arith.truncf %77 : vector<8x8xf32> to vector<8x8xbf16>
    %c0_26 = arith.constant 0 : index
    %c0_27 = arith.constant 0 : index
    %c0_28 = arith.constant 0 : index
    %c0_29 = arith.constant 0 : index
    %79 = vector.load %arg13[%c0_26, %c0_27, %c0_28, %c0_29] : memref<1x4x8x32xbf16, #tpu.memory_space<vmem>>, vector<1x1x8x32xbf16>
    %80 = vector.shape_cast %79 : vector<1x1x8x32xbf16> to vector<8x32xbf16>
    %cst_30 = arith.constant dense<0.000000e+00> : vector<8x32xf32>
    %81 = tpu.matmul %78, %80, %cst_30 {dimension_numbers = #tpu.dot_dimension_numbers<[1], [0], [0], [1], [0, 0, 1, 1], [], []>} : vector<8x8xbf16>, vector<8x32xbf16>, vector<8x32xf32> -> vector<8x32xf32>
    %82 = vector.extract_strided_slice %75 {offsets = [1, 0, 0], sizes = [1, 8, 8], strides = [1, 1, 1]} : vector<4x8x8xf32> to vector<1x8x8xf32>
    %83 = vector.shape_cast %82 : vector<1x8x8xf32> to vector<8x8xf32>
    %84 = arith.truncf %83 : vector<8x8xf32> to vector<8x8xbf16>
    %c0_31 = arith.constant 0 : index
    %c1 = arith.constant 1 : index
    %c0_32 = arith.constant 0 : index
    %c0_33 = arith.constant 0 : index
    %85 = vector.load %arg13[%c0_31, %c1, %c0_32, %c0_33] : memref<1x4x8x32xbf16, #tpu.memory_space<vmem>>, vector<1x1x8x32xbf16>
    %86 = vector.shape_cast %85 : vector<1x1x8x32xbf16> to vector<8x32xbf16>
    %cst_34 = arith.constant dense<0.000000e+00> : vector<8x32xf32>
    %87 = tpu.matmul %84, %86, %cst_34 {dimension_numbers = #tpu.dot_dimension_numbers<[1], [0], [0], [1], [0, 0, 1, 1], [], []>} : vector<8x8xbf16>, vector<8x32xbf16>, vector<8x32xf32> -> vector<8x32xf32>
    %88 = arith.addf %81, %87 : vector<8x32xf32>
    %89 = vector.extract_strided_slice %75 {offsets = [2, 0, 0], sizes = [1, 8, 8], strides = [1, 1, 1]} : vector<4x8x8xf32> to vector<1x8x8xf32>
    %90 = vector.shape_cast %89 : vector<1x8x8xf32> to vector<8x8xf32>
    %91 = arith.truncf %90 : vector<8x8xf32> to vector<8x8xbf16>
    %c0_35 = arith.constant 0 : index
    %c2 = arith.constant 2 : index
    %c0_36 = arith.constant 0 : index
    %c0_37 = arith.constant 0 : index
    %92 = vector.load %arg13[%c0_35, %c2, %c0_36, %c0_37] : memref<1x4x8x32xbf16, #tpu.memory_space<vmem>>, vector<1x1x8x32xbf16>
    %93 = vector.shape_cast %92 : vector<1x1x8x32xbf16> to vector<8x32xbf16>
    %cst_38 = arith.constant dense<0.000000e+00> : vector<8x32xf32>
    %94 = tpu.matmul %91, %93, %cst_38 {dimension_numbers = #tpu.dot_dimension_numbers<[1], [0], [0], [1], [0, 0, 1, 1], [], []>} : vector<8x8xbf16>, vector<8x32xbf16>, vector<8x32xf32> -> vector<8x32xf32>
    %95 = arith.addf %88, %94 : vector<8x32xf32>
    %96 = vector.extract_strided_slice %75 {offsets = [3, 0, 0], sizes = [1, 8, 8], strides = [1, 1, 1]} : vector<4x8x8xf32> to vector<1x8x8xf32>
    %97 = vector.shape_cast %96 : vector<1x8x8xf32> to vector<8x8xf32>
    %98 = arith.truncf %97 : vector<8x8xf32> to vector<8x8xbf16>
    %c0_39 = arith.constant 0 : index
    %c3 = arith.constant 3 : index
    %c0_40 = arith.constant 0 : index
    %c0_41 = arith.constant 0 : index
    %99 = vector.load %arg13[%c0_39, %c3, %c0_40, %c0_41] : memref<1x4x8x32xbf16, #tpu.memory_space<vmem>>, vector<1x1x8x32xbf16>
    %100 = vector.shape_cast %99 : vector<1x1x8x32xbf16> to vector<8x32xbf16>
    %cst_42 = arith.constant dense<0.000000e+00> : vector<8x32xf32>
    %101 = tpu.matmul %98, %100, %cst_42 {dimension_numbers = #tpu.dot_dimension_numbers<[1], [0], [0], [1], [0, 0, 1, 1], [], []>} : vector<8x8xbf16>, vector<8x32xbf16>, vector<8x32xf32> -> vector<8x32xf32>
    %102 = arith.addf %95, %101 : vector<8x32xf32>
    %103 = arith.addf %3, %102 : vector<8x32xf32>
    %c0_43 = arith.constant 0 : index
    %c0_44 = arith.constant 0 : index
    %c0_45 = arith.constant 0 : index
    %104 = vector.load %arg14[%c0_43, %c0_44, %c0_45] : memref<1x1x32xf32, #tpu.memory_space<vmem>>, vector<1x1x32xf32>
    %105 = vector.shape_cast %104 : vector<1x1x32xf32> to vector<1x32xf32>
    %106 = vector.broadcast %105 : vector<1x32xf32> to vector<8x32xf32>
    %107 = arith.addf %103, %106 : vector<8x32xf32>
    %c0_46 = arith.constant 0 : index
    %c0_47 = arith.constant 0 : index
    %c0_48 = arith.constant 0 : index
    %108 = vector.load %arg15[%c0_46, %c0_47, %c0_48] : memref<1x1x32xf32, #tpu.memory_space<vmem>>, vector<1x1x32xf32>
    %109 = vector.shape_cast %108 : vector<1x1x32xf32> to vector<1x32xf32>
    %c0_49 = arith.constant 0 : index
    %c0_50 = arith.constant 0 : index
    %c0_51 = arith.constant 0 : index
    %110 = vector.load %arg16[%c0_49, %c0_50, %c0_51] : memref<1x1x32xf32, #tpu.memory_space<vmem>>, vector<1x1x32xf32>
    %111 = vector.shape_cast %110 : vector<1x1x32xf32> to vector<1x32xf32>
    %cst_52 = arith.constant dense<0.000000e+00> : vector<8xf32>
    %112 = vector.multi_reduction <add>, %107, %cst_52 [1] : vector<8x32xf32> to vector<8xf32>
    %113 = vector.shape_cast %112 : vector<8xf32> to vector<8x1xf32>
    %cst_53 = arith.constant 3.200000e+01 : f32
    %114 = vector.broadcast %cst_53 : f32 to vector<8x1xf32>
    %115 = arith.divf %113, %114 : vector<8x1xf32>
    %116 = vector.broadcast %115 : vector<8x1xf32> to vector<8x32xf32>
    %117 = arith.subf %107, %116 : vector<8x32xf32>
    %118 = arith.mulf %117, %117 : vector<8x32xf32>
    %cst_54 = arith.constant dense<0.000000e+00> : vector<8xf32>
    %119 = vector.multi_reduction <add>, %118, %cst_54 [1] : vector<8x32xf32> to vector<8xf32>
    %120 = vector.shape_cast %119 : vector<8xf32> to vector<8x1xf32>
    %cst_55 = arith.constant 3.200000e+01 : f32
    %121 = vector.broadcast %cst_55 : f32 to vector<8x1xf32>
    %122 = arith.divf %120, %121 : vector<8x1xf32>
    %123 = vector.broadcast %115 : vector<8x1xf32> to vector<8x32xf32>
    %124 = arith.subf %107, %123 : vector<8x32xf32>
    %cst_56 = arith.constant 9.99999974E-6 : f32
    %125 = vector.broadcast %cst_56 : f32 to vector<8x1xf32>
    %126 = arith.addf %122, %125 : vector<8x1xf32>
    %127 = math.rsqrt %126 : vector<8x1xf32>
    %128 = vector.broadcast %127 : vector<8x1xf32> to vector<8x32xf32>
    %129 = arith.mulf %124, %128 : vector<8x32xf32>
    %130 = vector.broadcast %109 : vector<1x32xf32> to vector<8x32xf32>
    %131 = arith.mulf %129, %130 : vector<8x32xf32>
    %132 = vector.broadcast %111 : vector<1x32xf32> to vector<8x32xf32>
    %133 = arith.addf %131, %132 : vector<8x32xf32>
    %134 = arith.truncf %133 : vector<8x32xf32> to vector<8x32xbf16>
    %c0_57 = arith.constant 0 : index
    %c0_58 = arith.constant 0 : index
    %c0_59 = arith.constant 0 : index
    %135 = vector.load %arg17[%c0_57, %c0_58, %c0_59] : memref<1x32x128xbf16, #tpu.memory_space<vmem>>, vector<1x32x128xbf16>
    %136 = vector.shape_cast %135 : vector<1x32x128xbf16> to vector<32x128xbf16>
    %cst_60 = arith.constant dense<0.000000e+00> : vector<8x128xf32>
    %137 = tpu.matmul %134, %136, %cst_60 {dimension_numbers = #tpu.dot_dimension_numbers<[1], [0], [0], [1], [0, 0, 1, 1], [], []>} : vector<8x32xbf16>, vector<32x128xbf16>, vector<8x128xf32> -> vector<8x128xf32>
    %c0_61 = arith.constant 0 : index
    %c0_62 = arith.constant 0 : index
    %c0_63 = arith.constant 0 : index
    %138 = vector.load %arg18[%c0_61, %c0_62, %c0_63] : memref<1x1x128xf32, #tpu.memory_space<vmem>>, vector<1x1x128xf32>
    %139 = vector.shape_cast %138 : vector<1x1x128xf32> to vector<1x128xf32>
    %140 = vector.broadcast %139 : vector<1x128xf32> to vector<8x128xf32>
    %141 = arith.addf %137, %140 : vector<8x128xf32>
    %cst_64 = arith.constant 5.000000e-01 : f32
    %142 = vector.broadcast %cst_64 : f32 to vector<8x128xf32>
    %143 = arith.mulf %142, %141 : vector<8x128xf32>
    %144 = arith.mulf %141, %141 : vector<8x128xf32>
    %145 = arith.mulf %144, %141 : vector<8x128xf32>
    %cst_65 = arith.constant 4.471500e-02 : f32
    %146 = vector.broadcast %cst_65 : f32 to vector<8x128xf32>
    %147 = arith.mulf %146, %145 : vector<8x128xf32>
    %148 = arith.addf %141, %147 : vector<8x128xf32>
    %cst_66 = arith.constant 0.797884583 : f32
    %149 = vector.broadcast %cst_66 : f32 to vector<8x128xf32>
    %150 = arith.mulf %149, %148 : vector<8x128xf32>
    %151 = math.tanh %150 : vector<8x128xf32>
    %cst_67 = arith.constant 1.000000e+00 : f32
    %152 = vector.broadcast %cst_67 : f32 to vector<8x128xf32>
    %153 = arith.addf %152, %151 : vector<8x128xf32>
    %154 = arith.mulf %143, %153 : vector<8x128xf32>
    %155 = arith.truncf %154 : vector<8x128xf32> to vector<8x128xbf16>
    %c0_68 = arith.constant 0 : index
    %c0_69 = arith.constant 0 : index
    %c0_70 = arith.constant 0 : index
    %156 = vector.load %arg19[%c0_68, %c0_69, %c0_70] : memref<1x128x32xbf16, #tpu.memory_space<vmem>>, vector<1x128x32xbf16>
    %157 = vector.shape_cast %156 : vector<1x128x32xbf16> to vector<128x32xbf16>
    %cst_71 = arith.constant dense<0.000000e+00> : vector<8x32xf32>
    %158 = tpu.matmul %155, %157, %cst_71 {dimension_numbers = #tpu.dot_dimension_numbers<[1], [0], [0], [1], [0, 0, 1, 1], [], []>} : vector<8x128xbf16>, vector<128x32xbf16>, vector<8x32xf32> -> vector<8x32xf32>
    %c0_72 = arith.constant 0 : index
    %c0_73 = arith.constant 0 : index
    %c0_74 = arith.constant 0 : index
    %159 = vector.load %arg20[%c0_72, %c0_73, %c0_74] : memref<1x1x32xf32, #tpu.memory_space<vmem>>, vector<1x1x32xf32>
    %160 = vector.shape_cast %159 : vector<1x1x32xf32> to vector<1x32xf32>
    %161 = vector.broadcast %160 : vector<1x32xf32> to vector<8x32xf32>
    %162 = arith.addf %158, %161 : vector<8x32xf32>
    %163 = arith.addf %107, %162 : vector<8x32xf32>
    %c0_75 = arith.constant 0 : index
    %c0_76 = arith.constant 0 : index
    %164 = vector.load %arg22[%c0_75, %c0_76] : memref<8x32xf32, #tpu.memory_space<vmem>>, vector<8x32xf32>
    tpu.vector_store %arg22[%c0_75, %c0_76], %163 {strides = array<i32>} : memref<8x32xf32, #tpu.memory_space<vmem>>, vector<8x32xf32>,
    %c1_i32 = arith.constant 1 : i32
    %165 = arith.cmpi eq, %arg1, %c1_i32 : i32
    %166 = arith.extui %165 : i1 to i32
    %c0_i32_77 = arith.constant 0 : i32
    %167 = arith.cmpi ne, %166, %c0_i32_77 : i32
    scf.if %167 {
      %c0_78 = arith.constant 0 : index
      %c0_79 = arith.constant 0 : index
      %168 = vector.load %arg6[%c0_78, %c0_79] : memref<1x32xf32, #tpu.memory_space<vmem>>, vector<1x32xf32>
      %c0_80 = arith.constant 0 : index
      %c0_81 = arith.constant 0 : index
      %169 = vector.load %arg7[%c0_80, %c0_81] : memref<1x32xf32, #tpu.memory_space<vmem>>, vector<1x32xf32>
      %cst_82 = arith.constant dense<0.000000e+00> : vector<8xf32>
      %170 = vector.multi_reduction <add>, %163, %cst_82 [1] : vector<8x32xf32> to vector<8xf32>
      %171 = vector.shape_cast %170 : vector<8xf32> to vector<8x1xf32>
      %cst_83 = arith.constant 3.200000e+01 : f32
      %172 = vector.broadcast %cst_83 : f32 to vector<8x1xf32>
      %173 = arith.divf %171, %172 : vector<8x1xf32>
      %174 = vector.broadcast %173 : vector<8x1xf32> to vector<8x32xf32>
      %175 = arith.subf %163, %174 : vector<8x32xf32>
      %176 = arith.mulf %175, %175 : vector<8x32xf32>
      %cst_84 = arith.constant dense<0.000000e+00> : vector<8xf32>
      %177 = vector.multi_reduction <add>, %176, %cst_84 [1] : vector<8x32xf32> to vector<8xf32>
      %178 = vector.shape_cast %177 : vector<8xf32> to vector<8x1xf32>
      %cst_85 = arith.constant 3.200000e+01 : f32
      %179 = vector.broadcast %cst_85 : f32 to vector<8x1xf32>
      %180 = arith.divf %178, %179 : vector<8x1xf32>
      %181 = vector.broadcast %173 : vector<8x1xf32> to vector<8x32xf32>
      %182 = arith.subf %163, %181 : vector<8x32xf32>
      %cst_86 = arith.constant 9.99999974E-6 : f32
      %183 = vector.broadcast %cst_86 : f32 to vector<8x1xf32>
      %184 = arith.addf %180, %183 : vector<8x1xf32>
      %185 = math.rsqrt %184 : vector<8x1xf32>
      %186 = vector.broadcast %185 : vector<8x1xf32> to vector<8x32xf32>
      %187 = arith.mulf %182, %186 : vector<8x32xf32>
      %188 = vector.broadcast %168 : vector<1x32xf32> to vector<8x32xf32>
      %189 = arith.mulf %187, %188 : vector<8x32xf32>
      %190 = vector.broadcast %169 : vector<1x32xf32> to vector<8x32xf32>
      %191 = arith.addf %189, %190 : vector<8x32xf32>
      %192 = vector.shape_cast %191 : vector<8x32xf32> to vector<1x8x32xf32>
      %c0_87 = arith.constant 0 : index
      %c0_88 = arith.constant 0 : index
      %193 = vector.load %arg8[%c0_87, %c0_88] : memref<1x32xf32, #tpu.memory_space<vmem>>, vector<1x32xf32>
      %194 = vector.shape_cast %193 : vector<1x32xf32> to vector<1x1x32xf32>
      %195 = vector.broadcast %194 : vector<1x1x32xf32> to vector<1x8x32xf32>
      %196 = arith.mulf %192, %195 : vector<1x8x32xf32>
      %cst_89 = arith.constant dense<0.000000e+00> : vector<1x8xf32>
      %197 = vector.multi_reduction <add>, %196, %cst_89 [2] : vector<1x8x32xf32> to vector<1x8xf32>
      %198 = vector.shape_cast %197 : vector<1x8xf32> to vector<1x1x8xf32>
      %c0_90 = arith.constant 0 : index
      %c0_91 = arith.constant 0 : index
      %c0_92 = arith.constant 0 : index
      %199 = vector.load %arg21[%c0_90, %c0_91, %c0_92] : memref<1x1x8xf32, #tpu.memory_space<vmem>>, vector<1x1x8xf32>
      tpu.vector_store %arg21[%c0_90, %c0_91, %c0_92], %198 {strides = array<i32>} : memref<1x1x8xf32, #tpu.memory_space<vmem>>, vector<1x1x8xf32>,
    } else {
    }
    return
  }
  func.func @transform_0(%arg0: i32, %arg1: i32) -> (i32, i32, i32) {
    %c0_i32 = arith.constant 0 : i32
    %c0_i32_0 = arith.constant 0 : i32
    %c0_i32_1 = arith.constant 0 : i32
    return %arg0, %c0_i32, %c0_i32_0 : i32, i32, i32
  }
  func.func @transform_1(%arg0: i32, %arg1: i32) -> (i32, i32) {
    %c0_i32 = arith.constant 0 : i32
    %c0_i32_0 = arith.constant 0 : i32
    %c0_i32_1 = arith.constant 0 : i32
    return %c0_i32, %c0_i32_0 : i32, i32
  }
  func.func @transform_2(%arg0: i32, %arg1: i32) -> (i32, i32) {
    %c0_i32 = arith.constant 0 : i32
    %c0_i32_0 = arith.constant 0 : i32
    %c0_i32_1 = arith.constant 0 : i32
    return %c0_i32, %c0_i32_0 : i32, i32
  }
  func.func @transform_3(%arg0: i32, %arg1: i32) -> (i32, i32) {
    %c0_i32 = arith.constant 0 : i32
    %c0_i32_0 = arith.constant 0 : i32
    %c0_i32_1 = arith.constant 0 : i32
    return %c0_i32, %c0_i32_0 : i32, i32
  }
  func.func @transform_4(%arg0: i32, %arg1: i32) -> (i32, i32) {
    %c0_i32 = arith.constant 0 : i32
    %c0_i32_0 = arith.constant 0 : i32
    %c0_i32_1 = arith.constant 0 : i32
    return %c0_i32, %c0_i32_0 : i32, i32
  }
  func.func @transform_5(%arg0: i32, %arg1: i32) -> (i32, i32) {
    %c0_i32 = arith.constant 0 : i32
    %c0_i32_0 = arith.constant 0 : i32
    %c0_i32_1 = arith.constant 0 : i32
    return %c0_i32, %c0_i32_0 : i32, i32
  }
  func.func @transform_6(%arg0: i32, %arg1: i32) -> (i32, i32) {
    %c0_i32 = arith.constant 0 : i32
    %c0_i32_0 = arith.constant 0 : i32
    %c0_i32_1 = arith.constant 0 : i32
    return %c0_i32, %c0_i32_0 : i32, i32
  }
  func.func @transform_7(%arg0: i32, %arg1: i32) -> (i32, i32, i32) {
    %c0_i32 = arith.constant 0 : i32
    %c0_i32_0 = arith.constant 0 : i32
    %c0_i32_1 = arith.constant 0 : i32
    return %arg1, %c0_i32, %c0_i32_0 : i32, i32, i32
  }
  func.func @transform_8(%arg0: i32, %arg1: i32) -> (i32, i32, i32) {
    %c0_i32 = arith.constant 0 : i32
    %c0_i32_0 = arith.constant 0 : i32
    %c0_i32_1 = arith.constant 0 : i32
    return %arg1, %c0_i32, %c0_i32_0 : i32, i32, i32
  }
  func.func @transform_9(%arg0: i32, %arg1: i32) -> (i32, i32, i32) {
    %c0_i32 = arith.constant 0 : i32
    %c0_i32_0 = arith.constant 0 : i32
    %c0_i32_1 = arith.constant 0 : i32
    return %arg1, %c0_i32, %c0_i32_0 : i32, i32, i32
  }
  func.func @transform_10(%arg0: i32, %arg1: i32) -> (i32, i32, i32) {
    %c0_i32 = arith.constant 0 : i32
    %c0_i32_0 = arith.constant 0 : i32
    %c0_i32_1 = arith.constant 0 : i32
    return %arg1, %c0_i32, %c0_i32_0 : i32, i32, i32
  }
  func.func @transform_11(%arg0: i32, %arg1: i32) -> (i32, i32, i32, i32) {
    %c0_i32 = arith.constant 0 : i32
    %c0_i32_0 = arith.constant 0 : i32
    %c0_i32_1 = arith.constant 0 : i32
    %c0_i32_2 = arith.constant 0 : i32
    return %arg1, %c0_i32, %c0_i32_0, %c0_i32_1 : i32, i32, i32, i32
  }
  func.func @transform_12(%arg0: i32, %arg1: i32) -> (i32, i32, i32) {
    %c0_i32 = arith.constant 0 : i32
    %c0_i32_0 = arith.constant 0 : i32
    %c0_i32_1 = arith.constant 0 : i32
    return %arg1, %c0_i32, %c0_i32_0 : i32, i32, i32
  }
  func.func @transform_13(%arg0: i32, %arg1: i32) -> (i32, i32, i32) {
    %c0_i32 = arith.constant 0 : i32
    %c0_i32_0 = arith.constant 0 : i32
    %c0_i32_1 = arith.constant 0 : i32
    return %arg1, %c0_i32, %c0_i32_0 : i32, i32, i32
  }
  func.func @transform_14(%arg0: i32, %arg1: i32) -> (i32, i32, i32) {
    %c0_i32 = arith.constant 0 : i32
    %c0_i32_0 = arith.constant 0 : i32
    %c0_i32_1 = arith.constant 0 : i32
    return %arg1, %c0_i32, %c0_i32_0 : i32, i32, i32
  }
  func.func @transform_15(%arg0: i32, %arg1: i32) -> (i32, i32, i32) {
    %c0_i32 = arith.constant 0 : i32
    %c0_i32_0 = arith.constant 0 : i32
    %c0_i32_1 = arith.constant 0 : i32
    return %arg1, %c0_i32, %c0_i32_0 : i32, i32, i32
  }
  func.func @transform_16(%arg0: i32, %arg1: i32) -> (i32, i32, i32) {
    %c0_i32 = arith.constant 0 : i32
    %c0_i32_0 = arith.constant 0 : i32
    %c0_i32_1 = arith.constant 0 : i32
    return %arg1, %c0_i32, %c0_i32_0 : i32, i32, i32
  }
  func.func @transform_17(%arg0: i32, %arg1: i32) -> (i32, i32, i32) {
    %c0_i32 = arith.constant 0 : i32
    %c0_i32_0 = arith.constant 0 : i32
    %c0_i32_1 = arith.constant 0 : i32
    return %arg1, %c0_i32, %c0_i32_0 : i32, i32, i32
  }
  func.func @transform_18(%arg0: i32, %arg1: i32) -> (i32, i32, i32) {
    %c0_i32 = arith.constant 0 : i32
    %c0_i32_0 = arith.constant 0 : i32
    %c0_i32_1 = arith.constant 0 : i32
    return %arg1, %c0_i32, %c0_i32_0 : i32, i32, i32
  }
  func.func @transform_19(%arg0: i32, %arg1: i32) -> (i32, i32, i32) {
    %c0_i32 = arith.constant 0 : i32
    %c0_i32_0 = arith.constant 0 : i32
    %c0_i32_1 = arith.constant 0 : i32
    return %arg0, %c0_i32, %c0_i32_0 : i32, i32, i32
  }
}

</mosaic_0001>

<llo_original>
// kernel: tpu_custom_call.1
$region0: #{tpu_custom_call.1}
  #allocation0 [shape = 'u32[]', space=smem, size = 0x4, offset = 0x4, fixed_abs, tag = 'smem constant byte address 0x4 - core index']
  #allocation1 [shape = 'u32[144,128]{1,0:T(1,128)}', space=vmem, size = 0x12000, scoped, tag = 'internal scratch']
  #allocation2 [shape = 'f32[8,32]{1,0:T(8,128)}', space=vmem, size = 0x1000, scoped, tag = 'scratch operand']
  #allocation3 [shape = 'f32[8,8]{1,0:T(8,128)}', space=vmem, size = 0x1000, scoped, tag = 'scratch operand']
  %s0 = inlined_call_operand.vmem [shape: f32[2,1,8], index: 0, kind: input, shape index: {}]
  %s1 = inlined_call_operand.vmem [shape: f32[1,32], index: 1, kind: input, shape index: {}]
  %s2 = inlined_call_operand.vmem [shape: f32[1,32], index: 2, kind: input, shape index: {}]
  %s3 = inlined_call_operand.vmem [shape: f32[8,32], index: 3, kind: input, shape index: {}]
  %s4 = inlined_call_operand.vmem [shape: f32[1,32], index: 4, kind: input, shape index: {}]
  %s5 = inlined_call_operand.vmem [shape: f32[1,32], index: 5, kind: input, shape index: {}]
  %s6 = inlined_call_operand.vmem [shape: f32[1,32], index: 6, kind: input, shape index: {}]
  %s7 = inlined_call_operand.vmem [shape: f32[2,1,32], index: 7, kind: input, shape index: {}]
  %s8 = inlined_call_operand.vmem [shape: f32[2,1,32], index: 8, kind: input, shape index: {}]
  %s9 = inlined_call_operand.vmem [shape: bf16[2,32,96], index: 9, kind: input, shape index: {}]
  %s10 = inlined_call_operand.vmem [shape: f32[2,1,96], index: 10, kind: input, shape index: {}]
  %s11 = inlined_call_operand.vmem [shape: bf16[2,4,8,32], index: 11, kind: input, shape index: {}]
  %s12 = inlined_call_operand.vmem [shape: f32[2,1,32], index: 12, kind: input, shape index: {}]
  %s13 = inlined_call_operand.vmem [shape: f32[2,1,32], index: 13, kind: input, shape index: {}]
  %s14 = inlined_call_operand.vmem [shape: f32[2,1,32], index: 14, kind: input, shape index: {}]
  %s15 = inlined_call_operand.vmem [shape: bf16[2,32,128], index: 15, kind: input, shape index: {}]
  %s16 = inlined_call_operand.vmem [shape: f32[2,1,128], index: 16, kind: input, shape index: {}]
  %s17 = inlined_call_operand.vmem [shape: bf16[2,128,32], index: 17, kind: input, shape index: {}]
  %s18 = inlined_call_operand.vmem [shape: f32[2,1,32], index: 18, kind: input, shape index: {}]
  %s19 = inlined_call_operand.hbm [shape: f32[2,1,8], index: 19, kind: output, shape index: {}]
  %s20 = sld [smem:[#allocation0]]
  $region117: #{tpu_custom_call.1} parent=0
    _
  %s22 = ssub.s32 1, %s20
  %s23 = scalar_select 0, %s22, %s20
  $region1: #{tpu_custom_call.1} parent=0
    #allocation4 [shape = 'u8[1024]{0}', space=vmem, size = 0x400, scoped, tag = 'output window, operand 0']
    #allocation5 [shape = 's32[2]{0}', space=sflag, size = 0x8, scoped, tag = 'scoped memory for tpu_custom_call.1']
    %24 = vsyncpa [#allocation5], 0
    %s25 = scalar_lea.sflag [#allocation5], 1
    %26 = vsyncpa %s25, 0
    loop: start=0, step=1, limit=6
    $region2: #{tpu_custom_call.1} parent=1 // loop_pre_header
      _
    $region3: #{tpu_custom_call.1} parent=1 // loop_header
      %s28 = sphi 0, %s32
      %p29 = scmp.ge.s32.totalorder %s28, 6
      %s35 = sphi 0, %s47
      %s36 = sphi 0, %s43
      %s37 = sphi 0, %s35
      %s38 = sphi 0, %s36
      %s39 = sphi 0, %s37
      %s40 = sphi 0, %s38
      %s50 = sphi 0, %s52
      %s53 = sphi 0, %s50
      %s54 = sphi 0, %s53
      %s70 = sphi 0, %s54
      %s74 = sphi 0, %s74
      %s76 = sphi 0, %s74
      %s77 = sphi 0, %s76
      %s91 = sphi 0, %s77
      %s95 = sphi 0, %s95
      %s97 = sphi 0, %s95
      %s98 = sphi 0, %s97
      %s112 = sphi 0, %s98
      %s116 = sphi 0, %s116
      %s118 = sphi 0, %s116
      %s119 = sphi 0, %s118
      %s133 = sphi 0, %s119
      %s137 = sphi 0, %s137
      %s139 = sphi 0, %s137
      %s140 = sphi 0, %s139
      %s154 = sphi 0, %s140
      %s158 = sphi 0, %s158
      %s160 = sphi 0, %s158
      %s161 = sphi 0, %s160
      %s175 = sphi 0, %s161
      %s179 = sphi 0, %s179
      %s181 = sphi 0, %s179
      %s182 = sphi 0, %s181
      %s196 = sphi 0, %s182
      %s202 = sphi 0, %s204
      %s205 = sphi 0, %s202
      %s206 = sphi 0, %s205
      %s222 = sphi 0, %s206
      %s228 = sphi 0, %s230
      %s231 = sphi 0, %s228
      %s232 = sphi 0, %s231
      %s248 = sphi 0, %s232
      %s254 = sphi 0, %s256
      %s257 = sphi 0, %s254
      %s258 = sphi 0, %s257
      %s274 = sphi 0, %s258
      %s280 = sphi 0, %s282
      %s283 = sphi 0, %s280
      %s284 = sphi 0, %s283
      %s300 = sphi 0, %s284
      %s306 = sphi 0, %s308
      %s309 = sphi 0, %s306
      %s310 = sphi 0, %s309
      %s326 = sphi 0, %s310
      %s332 = sphi 0, %s334
      %s335 = sphi 0, %s332
      %s336 = sphi 0, %s335
      %s352 = sphi 0, %s336
      %s358 = sphi 0, %s360
      %s361 = sphi 0, %s358
      %s362 = sphi 0, %s361
      %s378 = sphi 0, %s362
      %s384 = sphi 0, %s386
      %s387 = sphi 0, %s384
      %s388 = sphi 0, %s387
      %s404 = sphi 0, %s388
      %s410 = sphi 0, %s412
      %s413 = sphi 0, %s410
      %s414 = sphi 0, %s413
      %s430 = sphi 0, %s414
      %s436 = sphi 0, %s438
      %s439 = sphi 0, %s436
      %s440 = sphi 0, %s439
      %s456 = sphi 0, %s440
      %s462 = sphi 0, %s464
      %s465 = sphi 0, %s462
      %s466 = sphi 0, %s465
      %s482 = sphi 0, %s466
      %s488 = sphi 0, %s490
      %s491 = sphi 0, %s488
      %s492 = sphi 0, %s491
      %s508 = sphi 0, %s492
      %s514 = sphi 0, %s516
      %s517 = sphi 0, %s514
      %s518 = sphi 0, %s517
      %s534 = sphi 0, %s518
    $region4: #{tpu_custom_call.1} parent=1 // loop_header_branch
      %31 = sbr.rel (%p29) target = $region8
    $region5: #{tpu_custom_call.1} parent=1 // loop_body
      %s33 = ssub.s32 %s28, 1
      %s34 = ssub.s32 %s28, 2
      %s41 = sadd.s32 1, %s36
      %p42 = scmp.ge.s32.totalorder %s41, 2
      %s43 = scalar_select %p42, 0, %s41
      %s44 = sadd.s32 1, %s35
      %s45 = scalar_select %p42, %s44, %s35
      %p46 = scmp.ge.s32.totalorder %s45, 2
      %s47 = scalar_select %p46, 0, %s45
      %s48 = ssub.s32 %s35, %s47
      %p49 = scmp.eq.s32.totalorder %s48, 0
      %s51 = sadd.s32 %s50, 1
      %s52 = scalar_select %p49, %s50, %s51
      %p55 = pneg %p49
      %p56 = scmp.eq.s32.totalorder %s28, 3
      %p57 = por %p55, %p56
      %p58 = scmp.ne.s32.totalorder %s50, %s53
      %p59 = scmp.eq.s32.totalorder %s28, 0
      %p60 = por %p58, %p59
      %p61 = scmp.ne.s32.totalorder %s50, %s53
      %p62 = scmp.eq.s32.totalorder %s33, 3
      %p63 = por %p61, %p62
      %p64 = scmp.ne.s32.totalorder %s53, %s54
      %p65 = scmp.eq.s32.totalorder %s33, 0
      %p66 = por %p64, %p65
      %p67 = scmp.ne.s32.totalorder %s53, %s54
      %p68 = scmp.eq.s32.totalorder %s34, 3
      %p69 = por %p67, %p68
      %p71 = scmp.ne.s32.totalorder %s54, %s70
      %p72 = scmp.eq.s32.totalorder %s34, 0
      %p73 = por %p71, %p72
      %s75 = sadd.s32 %s74, 1
      %p78 = scmp.eq.s32.totalorder %s28, 3
      %p79 = scmp.ne.s32.totalorder %s74, %s76
      %p80 = scmp.eq.s32.totalorder %s28, 0
      %p81 = por %p79, %p80
      %p82 = scmp.ne.s32.totalorder %s74, %s76
      %p83 = scmp.eq.s32.totalorder %s33, 3
      %p84 = por %p82, %p83
      %p85 = scmp.ne.s32.totalorder %s76, %s77
      %p86 = scmp.eq.s32.totalorder %s33, 0
      %p87 = por %p85, %p86
      %p88 = scmp.ne.s32.totalorder %s76, %s77
      %p89 = scmp.eq.s32.totalorder %s34, 3
      %p90 = por %p88, %p89
      %p92 = scmp.ne.s32.totalorder %s77, %s91
      %p93 = scmp.eq.s32.totalorder %s34, 0
      %p94 = por %p92, %p93
      %s96 = sadd.s32 %s95, 1
      %p99 = scmp.eq.s32.totalorder %s28, 3
      %p100 = scmp.ne.s32.totalorder %s95, %s97
      %p101 = scmp.eq.s32.totalorder %s28, 0
      %p102 = por %p100, %p101
      %p103 = scmp.ne.s32.totalorder %s95, %s97
      %p104 = scmp.eq.s32.totalorder %s33, 3
      %p105 = por %p103, %p104
      %p106 = scmp.ne.s32.totalorder %s97, %s98
      %p107 = scmp.eq.s32.totalorder %s33, 0
      %p108 = por %p106, %p107
      %p109 = scmp.ne.s32.totalorder %s97, %s98
      %p110 = scmp.eq.s32.totalorder %s34, 3
      %p111 = por %p109, %p110
      %p113 = scmp.ne.s32.totalorder %s98, %s112
      %p114 = scmp.eq.s32.totalorder %s34, 0
      %p115 = por %p113, %p114
      %s117 = sadd.s32 %s116, 1
      %p120 = scmp.eq.s32.totalorder %s28, 3
      %p121 = scmp.ne.s32.totalorder %s116, %s118
      %p122 = scmp.eq.s32.totalorder %s28, 0
      %p123 = por %p121, %p122
      %p124 = scmp.ne.s32.totalorder %s116, %s118
      %p125 = scmp.eq.s32.totalorder %s33, 3
      %p126 = por %p124, %p125
      %p127 = scmp.ne.s32.totalorder %s118, %s119
      %p128 = scmp.eq.s32.totalorder %s33, 0
      %p129 = por %p127, %p128
      %p130 = scmp.ne.s32.totalorder %s118, %s119
      %p131 = scmp.eq.s32.totalorder %s34, 3
      %p132 = por %p130, %p131
      %p134 = scmp.ne.s32.totalorder %s119, %s133
      %p135 = scmp.eq.s32.totalorder %s34, 0
      %p136 = por %p134, %p135
      %s138 = sadd.s32 %s137, 1
      %p141 = scmp.eq.s32.totalorder %s28, 3
      %p142 = scmp.ne.s32.totalorder %s137, %s139
      %p143 = scmp.eq.s32.totalorder %s28, 0
      %p144 = por %p142, %p143
      %p145 = scmp.ne.s32.totalorder %s137, %s139
      %p146 = scmp.eq.s32.totalorder %s33, 3
      %p147 = por %p145, %p146
      %p148 = scmp.ne.s32.totalorder %s139, %s140
      %p149 = scmp.eq.s32.totalorder %s33, 0
      %p150 = por %p148, %p149
      %p151 = scmp.ne.s32.totalorder %s139, %s140
      %p152 = scmp.eq.s32.totalorder %s34, 3
      %p153 = por %p151, %p152
      %p155 = scmp.ne.s32.totalorder %s140, %s154
      %p156 = scmp.eq.s32.totalorder %s34, 0
      %p157 = por %p155, %p156
      %s159 = sadd.s32 %s158, 1
      %p162 = scmp.eq.s32.totalorder %s28, 3
      %p163 = scmp.ne.s32.totalorder %s158, %s160
      %p164 = scmp.eq.s32.totalorder %s28, 0
      %p165 = por %p163, %p164
      %p166 = scmp.ne.s32.totalorder %s158, %s160
      %p167 = scmp.eq.s32.totalorder %s33, 3
      %p168 = por %p166, %p167
      %p169 = scmp.ne.s32.totalorder %s160, %s161
      %p170 = scmp.eq.s32.totalorder %s33, 0
      %p171 = por %p169, %p170
      %p172 = scmp.ne.s32.totalorder %s160, %s161
      %p173 = scmp.eq.s32.totalorder %s34, 3
      %p174 = por %p172, %p173
      %p176 = scmp.ne.s32.totalorder %s161, %s175
      %p177 = scmp.eq.s32.totalorder %s34, 0
      %p178 = por %p176, %p177
      %s180 = sadd.s32 %s179, 1
      %p183 = scmp.eq.s32.totalorder %s28, 3
      %p184 = scmp.ne.s32.totalorder %s179, %s181
      %p185 = scmp.eq.s32.totalorder %s28, 0
      %p186 = por %p184, %p185
      %p187 = scmp.ne.s32.totalorder %s179, %s181
      %p188 = scmp.eq.s32.totalorder %s33, 3
      %p189 = por %p187, %p188
      %p190 = scmp.ne.s32.totalorder %s181, %s182
      %p191 = scmp.eq.s32.totalorder %s33, 0
      %p192 = por %p190, %p191
      %p193 = scmp.ne.s32.totalorder %s181, %s182
      %p194 = scmp.eq.s32.totalorder %s34, 3
      %p195 = por %p193, %p194
      %p197 = scmp.ne.s32.totalorder %s182, %s196
      %p198 = scmp.eq.s32.totalorder %s34, 0
      %p199 = por %p197, %p198
      %s200 = ssub.s32 %s36, %s43
      %p201 = scmp.eq.s32.totalorder %s200, 0
      %s203 = sadd.s32 %s202, 1
      %s204 = scalar_select %p201, %s202, %s203
      %p207 = pneg %p201
      %p208 = scmp.eq.s32.totalorder %s28, 3
      %p209 = por %p207, %p208
      %p210 = scmp.ne.s32.totalorder %s202, %s205
      %p211 = scmp.eq.s32.totalorder %s28, 0
      %p212 = por %p210, %p211
      %p213 = scmp.ne.s32.totalorder %s202, %s205
      %p214 = scmp.eq.s32.totalorder %s33, 3
      %p215 = por %p213, %p214
      %p216 = scmp.ne.s32.totalorder %s205, %s206
      %p217 = scmp.eq.s32.totalorder %s33, 0
      %p218 = por %p216, %p217
      %p219 = scmp.ne.s32.totalorder %s205, %s206
      %p220 = scmp.eq.s32.totalorder %s34, 3
      %p221 = por %p219, %p220
      %p223 = scmp.ne.s32.totalorder %s206, %s222
      %p224 = scmp.eq.s32.totalorder %s34, 0
      %p225 = por %p223, %p224
      %s226 = ssub.s32 %s36, %s43
      %p227 = scmp.eq.s32.totalorder %s226, 0
      %s229 = sadd.s32 %s228, 1
      %s230 = scalar_select %p227, %s228, %s229
      %p233 = pneg %p227
      %p234 = scmp.eq.s32.totalorder %s28, 3
      %p235 = por %p233, %p234
      %p236 = scmp.ne.s32.totalorder %s228, %s231
      %p237 = scmp.eq.s32.totalorder %s28, 0
      %p238 = por %p236, %p237
      %p239 = scmp.ne.s32.totalorder %s228, %s231
      %p240 = scmp.eq.s32.totalorder %s33, 3
      %p241 = por %p239, %p240
      %p242 = scmp.ne.s32.totalorder %s231, %s232
      %p243 = scmp.eq.s32.totalorder %s33, 0
      %p244 = por %p242, %p243
      %p245 = scmp.ne.s32.totalorder %s231, %s232
      %p246 = scmp.eq.s32.totalorder %s34, 3
      %p247 = por %p245, %p246
      %p249 = scmp.ne.s32.totalorder %s232, %s248
      %p250 = scmp.eq.s32.totalorder %s34, 0
      %p251 = por %p249, %p250
      %s252 = ssub.s32 %s36, %s43
      %p253 = scmp.eq.s32.totalorder %s252, 0
      %s255 = sadd.s32 %s254, 1
      %s256 = scalar_select %p253, %s254, %s255
      %p259 = pneg %p253
      %p260 = scmp.eq.s32.totalorder %s28, 3
      %p261 = por %p259, %p260
      %p262 = scmp.ne.s32.totalorder %s254, %s257
      %p263 = scmp.eq.s32.totalorder %s28, 0
      %p264 = por %p262, %p263
      %p265 = scmp.ne.s32.totalorder %s254, %s257
      %p266 = scmp.eq.s32.totalorder %s33, 3
      %p267 = por %p265, %p266
      %p268 = scmp.ne.s32.totalorder %s257, %s258
      %p269 = scmp.eq.s32.totalorder %s33, 0
      %p270 = por %p268, %p269
      %p271 = scmp.ne.s32.totalorder %s257, %s258
      %p272 = scmp.eq.s32.totalorder %s34, 3
      %p273 = por %p271, %p272
      %p275 = scmp.ne.s32.totalorder %s258, %s274
      %p276 = scmp.eq.s32.totalorder %s34, 0
      %p277 = por %p275, %p276
      %s278 = ssub.s32 %s36, %s43
      %p279 = scmp.eq.s32.totalorder %s278, 0
      %s281 = sadd.s32 %s280, 1
      %s282 = scalar_select %p279, %s280, %s281
      %p285 = pneg %p279
      %p286 = scmp.eq.s32.totalorder %s28, 3
      %p287 = por %p285, %p286
      %p288 = scmp.ne.s32.totalorder %s280, %s283
      %p289 = scmp.eq.s32.totalorder %s28, 0
      %p290 = por %p288, %p289
      %p291 = scmp.ne.s32.totalorder %s280, %s283
      %p292 = scmp.eq.s32.totalorder %s33, 3
      %p293 = por %p291, %p292
      %p294 = scmp.ne.s32.totalorder %s283, %s284
      %p295 = scmp.eq.s32.totalorder %s33, 0
      %p296 = por %p294, %p295
      %p297 = scmp.ne.s32.totalorder %s283, %s284
      %p298 = scmp.eq.s32.totalorder %s34, 3
      %p299 = por %p297, %p298
      %p301 = scmp.ne.s32.totalorder %s284, %s300
      %p302 = scmp.eq.s32.totalorder %s34, 0
      %p303 = por %p301, %p302
      %s304 = ssub.s32 %s36, %s43
      %p305 = scmp.eq.s32.totalorder %s304, 0
      %s307 = sadd.s32 %s306, 1
      %s308 = scalar_select %p305, %s306, %s307
      %p311 = pneg %p305
      %p312 = scmp.eq.s32.totalorder %s28, 3
      %p313 = por %p311, %p312
      %p314 = scmp.ne.s32.totalorder %s306, %s309
      %p315 = scmp.eq.s32.totalorder %s28, 0
      %p316 = por %p314, %p315
      %p317 = scmp.ne.s32.totalorder %s306, %s309
      %p318 = scmp.eq.s32.totalorder %s33, 3
      %p319 = por %p317, %p318
      %p320 = scmp.ne.s32.totalorder %s309, %s310
      %p321 = scmp.eq.s32.totalorder %s33, 0
      %p322 = por %p320, %p321
      %p323 = scmp.ne.s32.totalorder %s309, %s310
      %p324 = scmp.eq.s32.totalorder %s34, 3
      %p325 = por %p323, %p324
      %p327 = scmp.ne.s32.totalorder %s310, %s326
      %p328 = scmp.eq.s32.totalorder %s34, 0
      %p329 = por %p327, %p328
      %s330 = ssub.s32 %s36, %s43
      %p331 = scmp.eq.s32.totalorder %s330, 0
      %s333 = sadd.s32 %s332, 1
      %s334 = scalar_select %p331, %s332, %s333
      %p337 = pneg %p331
      %p338 = scmp.eq.s32.totalorder %s28, 3
      %p339 = por %p337, %p338
      %p340 = scmp.ne.s32.totalorder %s332, %s335
      %p341 = scmp.eq.s32.totalorder %s28, 0
      %p342 = por %p340, %p341
      %p343 = scmp.ne.s32.totalorder %s332, %s335
      %p344 = scmp.eq.s32.totalorder %s33, 3
      %p345 = por %p343, %p344
      %p346 = scmp.ne.s32.totalorder %s335, %s336
      %p347 = scmp.eq.s32.totalorder %s33, 0
      %p348 = por %p346, %p347
      %p349 = scmp.ne.s32.totalorder %s335, %s336
      %p350 = scmp.eq.s32.totalorder %s34, 3
      %p351 = por %p349, %p350
      %p353 = scmp.ne.s32.totalorder %s336, %s352
      %p354 = scmp.eq.s32.totalorder %s34, 0
      %p355 = por %p353, %p354
      %s356 = ssub.s32 %s36, %s43
      %p357 = scmp.eq.s32.totalorder %s356, 0
      %s359 = sadd.s32 %s358, 1
      %s360 = scalar_select %p357, %s358, %s359
      %p363 = pneg %p357
      %p364 = scmp.eq.s32.totalorder %s28, 3
      %p365 = por %p363, %p364
      %p366 = scmp.ne.s32.totalorder %s358, %s361
      %p367 = scmp.eq.s32.totalorder %s28, 0
      %p368 = por %p366, %p367
      %p369 = scmp.ne.s32.totalorder %s358, %s361
      %p370 = scmp.eq.s32.totalorder %s33, 3
      %p371 = por %p369, %p370
      %p372 = scmp.ne.s32.totalorder %s361, %s362
      %p373 = scmp.eq.s32.totalorder %s33, 0
      %p374 = por %p372, %p373
      %p375 = scmp.ne.s32.totalorder %s361, %s362
      %p376 = scmp.eq.s32.totalorder %s34, 3
      %p377 = por %p375, %p376
      %p379 = scmp.ne.s32.totalorder %s362, %s378
      %p380 = scmp.eq.s32.totalorder %s34, 0
      %p381 = por %p379, %p380
      %s382 = ssub.s32 %s36, %s43
      %p383 = scmp.eq.s32.totalorder %s382, 0
      %s385 = sadd.s32 %s384, 1
      %s386 = scalar_select %p383, %s384, %s385
      %p389 = pneg %p383
      %p390 = scmp.eq.s32.totalorder %s28, 3
      %p391 = por %p389, %p390
      %p392 = scmp.ne.s32.totalorder %s384, %s387
      %p393 = scmp.eq.s32.totalorder %s28, 0
      %p394 = por %p392, %p393
      %p395 = scmp.ne.s32.totalorder %s384, %s387
      %p396 = scmp.eq.s32.totalorder %s33, 3
      %p397 = por %p395, %p396
      %p398 = scmp.ne.s32.totalorder %s387, %s388
      %p399 = scmp.eq.s32.totalorder %s33, 0
      %p400 = por %p398, %p399
      %p401 = scmp.ne.s32.totalorder %s387, %s388
      %p402 = scmp.eq.s32.totalorder %s34, 3
      %p403 = por %p401, %p402
      %p405 = scmp.ne.s32.totalorder %s388, %s404
      %p406 = scmp.eq.s32.totalorder %s34, 0
      %p407 = por %p405, %p406
      %s408 = ssub.s32 %s36, %s43
      %p409 = scmp.eq.s32.totalorder %s408, 0
      %s411 = sadd.s32 %s410, 1
      %s412 = scalar_select %p409, %s410, %s411
      %p415 = pneg %p409
      %p416 = scmp.eq.s32.totalorder %s28, 3
      %p417 = por %p415, %p416
      %p418 = scmp.ne.s32.totalorder %s410, %s413
      %p419 = scmp.eq.s32.totalorder %s28, 0
      %p420 = por %p418, %p419
      %p421 = scmp.ne.s32.totalorder %s410, %s413
      %p422 = scmp.eq.s32.totalorder %s33, 3
      %p423 = por %p421, %p422
      %p424 = scmp.ne.s32.totalorder %s413, %s414
      %p425 = scmp.eq.s32.totalorder %s33, 0
      %p426 = por %p424, %p425
      %p427 = scmp.ne.s32.totalorder %s413, %s414
      %p428 = scmp.eq.s32.totalorder %s34, 3
      %p429 = por %p427, %p428
      %p431 = scmp.ne.s32.totalorder %s414, %s430
      %p432 = scmp.eq.s32.totalorder %s34, 0
      %p433 = por %p431, %p432
      %s434 = ssub.s32 %s36, %s43
      %p435 = scmp.eq.s32.totalorder %s434, 0
      %s437 = sadd.s32 %s436, 1
      %s438 = scalar_select %p435, %s436, %s437
      %p441 = pneg %p435
      %p442 = scmp.eq.s32.totalorder %s28, 3
      %p443 = por %p441, %p442
      %p444 = scmp.ne.s32.totalorder %s436, %s439
      %p445 = scmp.eq.s32.totalorder %s28, 0
      %p446 = por %p444, %p445
      %p447 = scmp.ne.s32.totalorder %s436, %s439
      %p448 = scmp.eq.s32.totalorder %s33, 3
      %p449 = por %p447, %p448
      %p450 = scmp.ne.s32.totalorder %s439, %s440
      %p451 = scmp.eq.s32.totalorder %s33, 0
      %p452 = por %p450, %p451
      %p453 = scmp.ne.s32.totalorder %s439, %s440
      %p454 = scmp.eq.s32.totalorder %s34, 3
      %p455 = por %p453, %p454
      %p457 = scmp.ne.s32.totalorder %s440, %s456
      %p458 = scmp.eq.s32.totalorder %s34, 0
      %p459 = por %p457, %p458
      %s460 = ssub.s32 %s36, %s43
      %p461 = scmp.eq.s32.totalorder %s460, 0
      %s463 = sadd.s32 %s462, 1
      %s464 = scalar_select %p461, %s462, %s463
      %p467 = pneg %p461
      %p468 = scmp.eq.s32.totalorder %s28, 3
      %p469 = por %p467, %p468
      %p470 = scmp.ne.s32.totalorder %s462, %s465
      %p471 = scmp.eq.s32.totalorder %s28, 0
      %p472 = por %p470, %p471
      %p473 = scmp.ne.s32.totalorder %s462, %s465
      %p474 = scmp.eq.s32.totalorder %s33, 3
      %p475 = por %p473, %p474
      %p476 = scmp.ne.s32.totalorder %s465, %s466
      %p477 = scmp.eq.s32.totalorder %s33, 0
      %p478 = por %p476, %p477
      %p479 = scmp.ne.s32.totalorder %s465, %s466
      %p480 = scmp.eq.s32.totalorder %s34, 3
      %p481 = por %p479, %p480
      %p483 = scmp.ne.s32.totalorder %s466, %s482
      %p484 = scmp.eq.s32.totalorder %s34, 0
      %p485 = por %p483, %p484
      %s486 = ssub.s32 %s36, %s43
      %p487 = scmp.eq.s32.totalorder %s486, 0
      %s489 = sadd.s32 %s488, 1
      %s490 = scalar_select %p487, %s488, %s489
      %p493 = pneg %p487
      %p494 = scmp.eq.s32.totalorder %s28, 3
      %p495 = por %p493, %p494
      %p496 = scmp.ne.s32.totalorder %s488, %s491
      %p497 = scmp.eq.s32.totalorder %s28, 0
      %p498 = por %p496, %p497
      %p499 = scmp.ne.s32.totalorder %s488, %s491
      %p500 = scmp.eq.s32.totalorder %s33, 3
      %p501 = por %p499, %p500
      %p502 = scmp.ne.s32.totalorder %s491, %s492
      %p503 = scmp.eq.s32.totalorder %s33, 0
      %p504 = por %p502, %p503
      %p505 = scmp.ne.s32.totalorder %s491, %s492
      %p506 = scmp.eq.s32.totalorder %s34, 3
      %p507 = por %p505, %p506
      %p509 = scmp.ne.s32.totalorder %s492, %s508
      %p510 = scmp.eq.s32.totalorder %s34, 0
      %p511 = por %p509, %p510
      %s512 = ssub.s32 %s35, %s47
      %p513 = scmp.eq.s32.totalorder %s512, 0
      %s515 = sadd.s32 %s514, 1
      %s516 = scalar_select %p513, %s514, %s515
      %p519 = pneg %p513
      %p520 = scmp.eq.s32.totalorder %s28, 3
      %p521 = por %p519, %p520
      %p522 = scmp.ne.s32.totalorder %s514, %s517
      %p523 = scmp.eq.s32.totalorder %s28, 0
      %p524 = por %p522, %p523
      %p525 = scmp.ne.s32.totalorder %s514, %s517
      %p526 = scmp.eq.s32.totalorder %s33, 3
      %p527 = por %p525, %p526
      %p528 = scmp.ne.s32.totalorder %s517, %s518
      %p529 = scmp.eq.s32.totalorder %s33, 0
      %p530 = por %p528, %p529
      %p531 = scmp.ne.s32.totalorder %s517, %s518
      %p532 = scmp.eq.s32.totalorder %s34, 3
      %p533 = por %p531, %p532
      %p535 = scmp.ne.s32.totalorder %s518, %s534
      %p536 = scmp.eq.s32.totalorder %s34, 0
      %p537 = por %p535, %p536
      %p538 = scmp.le.s32.totalorder 1, %s28
      %p539 = scmp.lt.s32.totalorder %s28, 5
      %p540 = pnand %p538, %p539
      %p541 = pneg %p540
      // Predicated region
      $region9: #{tpu_custom_call.1} parent=5 // pred_check
        _
      $region10: #{tpu_custom_call.1} parent=5 // pred_check_branch
        %543 = sbr.rel (%p540) target = $region12
      $region11: #{tpu_custom_call.1} parent=5 // pred_region
        %s544 = ssub.s32 %s28, 1
        // Predicated region
        $region13: #{tpu_custom_call.1} parent=11 // pred_check
          %p545 = pneg %p87
        $region14: #{tpu_custom_call.1} parent=11 // pred_check_branch
          %547 = sbr.rel (%p545) target = $region16
        $region15: #{tpu_custom_call.1} parent=11 // pred_region
          _
        $region16: #{tpu_custom_call.1} parent=11 // pred_fallthru
          _
        // Predicated region
        $region17: #{tpu_custom_call.1} parent=11 // pred_check
          %p548 = pneg %p108
        $region18: #{tpu_custom_call.1} parent=11 // pred_check_branch
          %550 = sbr.rel (%p548) target = $region20
        $region19: #{tpu_custom_call.1} parent=11 // pred_region
          _
        $region20: #{tpu_custom_call.1} parent=11 // pred_fallthru
          _
        // Predicated region
        $region21: #{tpu_custom_call.1} parent=11 // pred_check
          %p551 = pneg %p129
        $region22: #{tpu_custom_call.1} parent=11 // pred_check_branch
          %553 = sbr.rel (%p551) target = $region24
        $region23: #{tpu_custom_call.1} parent=11 // pred_region
          _
        $region24: #{tpu_custom_call.1} parent=11 // pred_fallthru
          _
        // Predicated region
        $region25: #{tpu_custom_call.1} parent=11 // pred_check
          %p554 = pneg %p150
        $region26: #{tpu_custom_call.1} parent=11 // pred_check_branch
          %556 = sbr.rel (%p554) target = $region28
        $region27: #{tpu_custom_call.1} parent=11 // pred_region
          _
        $region28: #{tpu_custom_call.1} parent=11 // pred_fallthru
          _
        // Predicated region
        $region29: #{tpu_custom_call.1} parent=11 // pred_check
          %p557 = pneg %p171
        $region30: #{tpu_custom_call.1} parent=11 // pred_check_branch
          %559 = sbr.rel (%p557) target = $region32
        $region31: #{tpu_custom_call.1} parent=11 // pred_region
          _
        $region32: #{tpu_custom_call.1} parent=11 // pred_fallthru
          _
        // Predicated region
        $region33: #{tpu_custom_call.1} parent=11 // pred_check
          %p560 = pneg %p192
        $region34: #{tpu_custom_call.1} parent=11 // pred_check_branch
          %562 = sbr.rel (%p560) target = $region36
        $region35: #{tpu_custom_call.1} parent=11 // pred_region
          _
        $region36: #{tpu_custom_call.1} parent=11 // pred_fallthru
          _
      $region12: #{tpu_custom_call.1} parent=5 // pred_fallthru
        _
      %p563 = scmp.lt.s32.totalorder %s28, 4
      // Predicated region
      $region37: #{tpu_custom_call.1} parent=5 // pred_check
        %p564 = pneg %p563
      $region38: #{tpu_custom_call.1} parent=5 // pred_check_branch
        %566 = sbr.rel (%p564) target = $region40
      $region39: #{tpu_custom_call.1} parent=5 // pred_region
        // Predicated region
        $region41: #{tpu_custom_call.1} parent=39 // pred_check
          %p567 = pneg %p60
        $region42: #{tpu_custom_call.1} parent=39 // pred_check_branch
          %569 = sbr.rel (%p567) target = $region44
        $region43: #{tpu_custom_call.1} parent=39 // pred_region
          %p570 = scmp.lt.s32.totalorder %s35, 1
          %s571 = scalar_select %p570, %s35, 1
          %s572 = scalar_lea.vmem %s0, %s571
        $region44: #{tpu_custom_call.1} parent=39 // pred_fallthru
          _
        // Predicated region
        $region45: #{tpu_custom_call.1} parent=39 // pred_check
          %p573 = pneg %p212
        $region46: #{tpu_custom_call.1} parent=39 // pred_check_branch
          %575 = sbr.rel (%p573) target = $region48
        $region47: #{tpu_custom_call.1} parent=39 // pred_region
          %p576 = scmp.lt.s32.totalorder %s36, 1
          %s577 = scalar_select %p576, %s36, 1
          %s578 = scalar_lea.vmem %s7, %s577
        $region48: #{tpu_custom_call.1} parent=39 // pred_fallthru
          _
        // Predicated region
        $region49: #{tpu_custom_call.1} parent=39 // pred_check
          %p579 = pneg %p238
        $region50: #{tpu_custom_call.1} parent=39 // pred_check_branch
          %581 = sbr.rel (%p579) target = $region52
        $region51: #{tpu_custom_call.1} parent=39 // pred_region
          %p582 = scmp.lt.s32.totalorder %s36, 1
          %s583 = scalar_select %p582, %s36, 1
          %s584 = scalar_lea.vmem %s8, %s583
        $region52: #{tpu_custom_call.1} parent=39 // pred_fallthru
          _
        // Predicated region
        $region53: #{tpu_custom_call.1} parent=39 // pred_check
          %p585 = pneg %p264
        $region54: #{tpu_custom_call.1} parent=39 // pred_check_branch
          %587 = sbr.rel (%p585) target = $region56
        $region55: #{tpu_custom_call.1} parent=39 // pred_region
          %p588 = scmp.lt.s32.totalorder %s36, 1
          %s589 = scalar_select %p588, %s36, 1
          %s590 = smul.addr %s589, 4
          %s591 = smul.addr %s590, 4
          %s592 = scalar_lea.vmem %s9, %s591
        $region56: #{tpu_custom_call.1} parent=39 // pred_fallthru
          _
        // Predicated region
        $region57: #{tpu_custom_call.1} parent=39 // pred_check
          %p593 = pneg %p290
        $region58: #{tpu_custom_call.1} parent=39 // pred_check_branch
          %595 = sbr.rel (%p593) target = $region60
        $region59: #{tpu_custom_call.1} parent=39 // pred_region
          %p596 = scmp.lt.s32.totalorder %s36, 1
          %s597 = scalar_select %p596, %s36, 1
          %s598 = scalar_lea.vmem %s10, %s597
        $region60: #{tpu_custom_call.1} parent=39 // pred_fallthru
          _
        // Predicated region
        $region61: #{tpu_custom_call.1} parent=39 // pred_check
          %p599 = pneg %p316
        $region62: #{tpu_custom_call.1} parent=39 // pred_check_branch
          %601 = sbr.rel (%p599) target = $region64
        $region63: #{tpu_custom_call.1} parent=39 // pred_region
          %p602 = scmp.lt.s32.totalorder %s36, 1
          %s603 = scalar_select %p602, %s36, 1
          %s604 = smul.addr %s603, 4
          %s605 = smul.addr %s604, 4
          %s606 = scalar_lea.vmem %s11, %s605
        $region64: #{tpu_custom_call.1} parent=39 // pred_fallthru
          _
        // Predicated region
        $region65: #{tpu_custom_call.1} parent=39 // pred_check
          %p607 = pneg %p342
        $region66: #{tpu_custom_call.1} parent=39 // pred_check_branch
          %609 = sbr.rel (%p607) target = $region68
        $region67: #{tpu_custom_call.1} parent=39 // pred_region
          %p610 = scmp.lt.s32.totalorder %s36, 1
          %s611 = scalar_select %p610, %s36, 1
          %s612 = scalar_lea.vmem %s12, %s611
        $region68: #{tpu_custom_call.1} parent=39 // pred_fallthru
          _
        // Predicated region
        $region69: #{tpu_custom_call.1} parent=39 // pred_check
          %p613 = pneg %p368
        $region70: #{tpu_custom_call.1} parent=39 // pred_check_branch
          %615 = sbr.rel (%p613) target = $region72
        $region71: #{tpu_custom_call.1} parent=39 // pred_region
          %p616 = scmp.lt.s32.totalorder %s36, 1
          %s617 = scalar_select %p616, %s36, 1
          %s618 = scalar_lea.vmem %s13, %s617
        $region72: #{tpu_custom_call.1} parent=39 // pred_fallthru
          _
        // Predicated region
        $region73: #{tpu_custom_call.1} parent=39 // pred_check
          %p619 = pneg %p394
        $region74: #{tpu_custom_call.1} parent=39 // pred_check_branch
          %621 = sbr.rel (%p619) target = $region76
        $region75: #{tpu_custom_call.1} parent=39 // pred_region
          %p622 = scmp.lt.s32.totalorder %s36, 1
          %s623 = scalar_select %p622, %s36, 1
          %s624 = scalar_lea.vmem %s14, %s623
        $region76: #{tpu_custom_call.1} parent=39 // pred_fallthru
          _
        // Predicated region
        $region77: #{tpu_custom_call.1} parent=39 // pred_check
          %p625 = pneg %p420
        $region78: #{tpu_custom_call.1} parent=39 // pred_check_branch
          %627 = sbr.rel (%p625) target = $region80
        $region79: #{tpu_custom_call.1} parent=39 // pred_region
          %p628 = scmp.lt.s32.totalorder %s36, 1
          %s629 = scalar_select %p628, %s36, 1
          %s630 = smul.addr %s629, 4
          %s631 = smul.addr %s630, 4
          %s632 = scalar_lea.vmem %s15, %s631
        $region80: #{tpu_custom_call.1} parent=39 // pred_fallthru
          _
        // Predicated region
        $region81: #{tpu_custom_call.1} parent=39 // pred_check
          %p633 = pneg %p446
        $region82: #{tpu_custom_call.1} parent=39 // pred_check_branch
          %635 = sbr.rel (%p633) target = $region84
        $region83: #{tpu_custom_call.1} parent=39 // pred_region
          %p636 = scmp.lt.s32.totalorder %s36, 1
          %s637 = scalar_select %p636, %s36, 1
          %s638 = scalar_lea.vmem %s16, %s637
        $region84: #{tpu_custom_call.1} parent=39 // pred_fallthru
          _
        // Predicated region
        $region85: #{tpu_custom_call.1} parent=39 // pred_check
          %p639 = pneg %p472
        $region86: #{tpu_custom_call.1} parent=39 // pred_check_branch
          %641 = sbr.rel (%p639) target = $region88
        $region87: #{tpu_custom_call.1} parent=39 // pred_region
          %p642 = scmp.lt.s32.totalorder %s36, 1
          %s643 = scalar_select %p642, %s36, 1
          %s644 = smul.addr %s643, 16
          %s645 = smul.addr %s644, 4
          %s646 = scalar_lea.vmem %s17, %s645
        $region88: #{tpu_custom_call.1} parent=39 // pred_fallthru
          _
        // Predicated region
        $region89: #{tpu_custom_call.1} parent=39 // pred_check
          %p647 = pneg %p498
        $region90: #{tpu_custom_call.1} parent=39 // pred_check_branch
          %649 = sbr.rel (%p647) target = $region92
        $region91: #{tpu_custom_call.1} parent=39 // pred_region
          %p650 = scmp.lt.s32.totalorder %s36, 1
          %s651 = scalar_select %p650, %s36, 1
          %s652 = scalar_lea.vmem %s18, %s651
        $region92: #{tpu_custom_call.1} parent=39 // pred_fallthru
          _
      $region40: #{tpu_custom_call.1} parent=5 // pred_fallthru
        _
      %p653 = scmp.le.s32.totalorder 1, %s28
      %p654 = scmp.lt.s32.totalorder %s28, 5
      %p655 = pnand %p653, %p654
      %p656 = pneg %p655
      // Predicated region
      $region93: #{tpu_custom_call.1} parent=5 // pred_check
        _
      $region94: #{tpu_custom_call.1} parent=5 // pred_check_branch
        %658 = sbr.rel (%p655) target = $region96
      $region95: #{tpu_custom_call.1} parent=5 // pred_region
        %s659 = ssub.s32 %s28, 1
        %p660 = scmp.lt.s32.totalorder %s37, 1
        %s661 = scalar_select %p660, %s37, 1
        %s662 = scalar_lea.vmem %s0, %s661
        %p663 = pneg %p66
        %p664 = pneg %p63
        %p665 = pneg %p87
        %p666 = pneg %p84
        %p667 = pneg %p108
        %p668 = pneg %p105
        %p669 = pneg %p129
        %p670 = pneg %p126
        %p671 = pneg %p150
        %p672 = pneg %p147
        %p673 = pneg %p171
        %p674 = pneg %p168
        %p675 = pneg %p192
        %p676 = pneg %p189
        %p677 = scmp.lt.s32.totalorder %s38, 1
        %s678 = scalar_select %p677, %s38, 1
        %s679 = scalar_lea.vmem %s7, %s678
        %p680 = pneg %p218
        %p681 = pneg %p215
        %p682 = scmp.lt.s32.totalorder %s38, 1
        %s683 = scalar_select %p682, %s38, 1
        %s684 = scalar_lea.vmem %s8, %s683
        %p685 = pneg %p244
        %p686 = pneg %p241
        %p687 = scmp.lt.s32.totalorder %s38, 1
        %s688 = scalar_select %p687, %s38, 1
        %s689 = smul.addr %s688, 4
        %s690 = smul.addr %s689, 4
        %s691 = scalar_lea.vmem %s9, %s690
        %p692 = pneg %p270
        %p693 = pneg %p267
        %p694 = scmp.lt.s32.totalorder %s38, 1
        %s695 = scalar_select %p694, %s38, 1
        %s696 = scalar_lea.vmem %s10, %s695
        %p697 = pneg %p296
        %p698 = pneg %p293
        %p699 = scmp.lt.s32.totalorder %s38, 1
        %s700 = scalar_select %p699, %s38, 1
        %s701 = smul.addr %s700, 4
        %s702 = smul.addr %s701, 4
        %s703 = scalar_lea.vmem %s11, %s702
        %p704 = pneg %p322
        %p705 = pneg %p319
        %p706 = scmp.lt.s32.totalorder %s38, 1
        %s707 = scalar_select %p706, %s38, 1
        %s708 = scalar_lea.vmem %s12, %s707
        %p709 = pneg %p348
        %p710 = pneg %p345
        %p711 = scmp.lt.s32.totalorder %s38, 1
        %s712 = scalar_select %p711, %s38, 1
        %s713 = scalar_lea.vmem %s13, %s712
        %p714 = pneg %p374
        %p715 = pneg %p371
        %p716 = scmp.lt.s32.totalorder %s38, 1
        %s717 = scalar_select %p716, %s38, 1
        %s718 = scalar_lea.vmem %s14, %s717
        %p719 = pneg %p400
        %p720 = pneg %p397
        %p721 = scmp.lt.s32.totalorder %s38, 1
        %s722 = scalar_select %p721, %s38, 1
        %s723 = smul.addr %s722, 4
        %s724 = smul.addr %s723, 4
        %s725 = scalar_lea.vmem %s15, %s724
        %p726 = pneg %p426
        %p727 = pneg %p423
        %p728 = scmp.lt.s32.totalorder %s38, 1
        %s729 = scalar_select %p728, %s38, 1
        %s730 = scalar_lea.vmem %s16, %s729
        %p731 = pneg %p452
        %p732 = pneg %p449
        %p733 = scmp.lt.s32.totalorder %s38, 1
        %s734 = scalar_select %p733, %s38, 1
        %s735 = smul.addr %s734, 16
        %s736 = smul.addr %s735, 4
        %s737 = scalar_lea.vmem %s17, %s736
        %p738 = pneg %p478
        %p739 = pneg %p475
        %p740 = scmp.lt.s32.totalorder %s38, 1
        %s741 = scalar_select %p740, %s38, 1
        %s742 = scalar_lea.vmem %s18, %s741
        %p743 = pneg %p504
        %p744 = pneg %p501
        %p745 = pneg %p530
        %p746 = pneg %p527
        %s747 = sand.u32 %s517, 1
        %s748 = scalar_lea.sflag [#allocation5], %s747
        %s749 = sand.u32 %s517, 1
        %s750 = scalar_lea.vmem [#allocation4], %s749
        %p751 = scmp.lt.s32.totalorder %s37, 1
        %s752 = scalar_select %p751, %s37, 1
        %s753 = scalar_lea.vmem %s0, %s752
        %p754 = scmp.lt.s32.totalorder %s38, 1
        %s755 = scalar_select %p754, %s38, 1
        %s756 = scalar_lea.vmem %s7, %s755
        %p757 = scmp.lt.s32.totalorder %s38, 1
        %s758 = scalar_select %p757, %s38, 1
        %s759 = scalar_lea.vmem %s8, %s758
        %p760 = scmp.lt.s32.totalorder %s38, 1
        %s761 = scalar_select %p760, %s38, 1
        %s762 = smul.addr %s761, 4
        %s763 = smul.addr %s762, 4
        %s764 = scalar_lea.vmem %s9, %s763
        %p765 = scmp.lt.s32.totalorder %s38, 1
        %s766 = scalar_select %p765, %s38, 1
        %s767 = scalar_lea.vmem %s10, %s766
        %p768 = scmp.lt.s32.totalorder %s38, 1
        %s769 = scalar_select %p768, %s38, 1
        %s770 = smul.addr %s769, 4
        %s771 = smul.addr %s770, 4
        %s772 = scalar_lea.vmem %s11, %s771
        %p773 = scmp.lt.s32.totalorder %s38, 1
        %s774 = scalar_select %p773, %s38, 1
        %s775 = scalar_lea.vmem %s12, %s774
        %p776 = scmp.lt.s32.totalorder %s38, 1
        %s777 = scalar_select %p776, %s38, 1
        %s778 = scalar_lea.vmem %s13, %s777
        %p779 = scmp.lt.s32.totalorder %s38, 1
        %s780 = scalar_select %p779, %s38, 1
        %s781 = scalar_lea.vmem %s14, %s780
        %p782 = scmp.lt.s32.totalorder %s38, 1
        %s783 = scalar_select %p782, %s38, 1
        %s784 = smul.addr %s783, 4
        %s785 = smul.addr %s784, 4
        %s786 = scalar_lea.vmem %s15, %s785
        %p787 = scmp.lt.s32.totalorder %s38, 1
        %s788 = scalar_select %p787, %s38, 1
        %s789 = scalar_lea.vmem %s16, %s788
        %p790 = scmp.lt.s32.totalorder %s38, 1
        %s791 = scalar_select %p790, %s38, 1
        %s792 = smul.addr %s791, 16
        %s793 = smul.addr %s792, 4
        %s794 = scalar_lea.vmem %s17, %s793
        %p795 = scmp.lt.s32.totalorder %s38, 1
        %s796 = scalar_select %p795, %s38, 1
        %s797 = scalar_lea.vmem %s18, %s796
        %p799 = scmp.eq.s32.totalorder %s38, 0
        // Predicated region
        $region97: #{tpu_custom_call.1} parent=95 // pred_check
          %p800 = pneg %p799
        $region98: #{tpu_custom_call.1} parent=95 // pred_check_branch
          %802 = sbr.rel (%p800) target = $region100
        $region99: #{tpu_custom_call.1} parent=95 // pred_region
          %v803 = vld [vmem:[%s753] sm:$0x1]
          %v804 = vld [vmem:[%s1] sm:$0x1]
          %v805 = vld [vmem:[%s2] sm:$0x1]
          %v806 = vlaneseq
          %v807 = vshrl.u32 %v806, 7
          %v808 = vsub.s32 0, %v807
          %v809 = vrot.slane %v803, %v808
          %811 = vbcast.lane.b32.xlu0 %v809, 256
          %v812 = vpop.permute.xlu0 %811
          %v814 = vlaneseq
          %v815 = vshrl.u32 %v814, 7
          %v816 = vsub.s32 0, %v815
          %v817 = vrot.slane %v804, %v816
          %v819 = vmul.f32 %v812, %v817
          %v821 = vlaneseq
          %v822 = vshrl.u32 %v821, 7
          %v823 = vsub.s32 0, %v822
          %v824 = vrot.slane %v805, %v823
          %v826 = vadd.f32 %v819, %v824
          %v827 = vld [vmem:[%s3] sm:$0xff]
          %v828 = vadd.f32 %v826, %v827
          %vm829 = vcmask 261120
          %830 = vst.msk [vmem:[#allocation2] sm:$0xff] %vm829, %v828
          %v831 = vlaneseq
          %v832 = vshrl.u32 %v831, 7
          %v833 = vlaneseq
          %v834 = vand.u32 %v833, 127
          %vm835 = vcmp.le.s32.totalorder %v834, %v832
          %v836 = vsel %vm835, 0.0, -1e+30
          %vm837 = vcmask 64512
          %838 = vst.msk [vmem:[#allocation3] sm:$0xff] %vm837, %v836
        $region100: #{tpu_custom_call.1} parent=95 // pred_fallthru
          _
        %v839 = vld [vmem:[#allocation2] sm:$0xff]
        %v840 = vld [vmem:[%s756] sm:$0x1]
        %v841 = vld [vmem:[%s759] sm:$0x1]
        %vm842 = vcmask 261120
        %v843 = vsel %vm842, %v839, 0.0
        %844 = vadd.xlane.f32.xlu0 %v843
        %v845 = vpop.xlane.xlu0 %844
        %v846 = vrcp.pop 32.0
        %v847 = vmul.f32 %v845, %v846
        %v848 = vsub.f32 %v839, %v847
        %v849 = vmul.f32 %v848, %v848
        %v850 = vsel %vm842, %v849, 0.0
        %851 = vadd.xlane.f32.xlu0 %v850
        %v852 = vpop.xlane.xlu0 %851
        %v853 = vmul.f32 %v852, %v846
        %v854 = vadd.f32 %v853, 1e-05
        %v855 = vrsqrt.pop %v854
        %v856 = vmul.f32 %v848, %v855
        %v858 = vlaneseq
        %v859 = vshrl.u32 %v858, 7
        %v860 = vsub.s32 0, %v859
        %v861 = vrot.slane %v840, %v860
        %v863 = vmul.f32 %v856, %v861
        %v865 = vlaneseq
        %v866 = vshrl.u32 %v865, 7
        %v867 = vsub.s32 0, %v866
        %v868 = vrot.slane %v841, %v867
        %v870 = vadd.f32 %v863, %v868
        %v871 = vpack.c.bf16 %v870, %v870
        %v872 = vld [vmem:[%s764] sm:$0xf]
        %v873 = vld [vmem:[%s764 + $0x4] sm:$0xf]
        %v874 = vld [vmem:[%s764 + $0x8] sm:$0xf]
        %v875 = vld [vmem:[%s764 + $0xc] sm:$0xf]
        %v876 = vld [vmem:[%s767] sm:$0x1]
        %v878 = vlaneseq
        %v879 = vshrl.u32 %v878, 7
        %v880 = vsub.s32 0, %v879
        %v881 = vrot.slane %v876, %v880
        %v887 = vunpack.c.l.b16 %v872
        %v888 = vunpack.c.l.b16 %v873
        %v889 = vunpack.c.l.b16 %v874
        %v890 = vunpack.c.l.b16 %v875
        %v891 = vpack.c.b16 %v888, %v887
        %v892 = vpack.c.b16 %v890, %v889
        %v896 = vsel %vm842, %v871, 0
        %898 = vmatprep.subr.bf16.mxu0 0
        %899 = vmatpush1.bf16.msra.mxu0 %v891
        %900 = vmatprep.subr.bf16.mxu0 0
        %901 = vmatpush1.bf16.msra.mxu0 %v892
        %902 = vmatprep.subr.bf16.mxu0 0
        %903 = vmatpush1.bf16.msra.mxu0 0
        %904 = vmatprep.subr.bf16.mxu0 0
        %905 = vmatpush1.bf16.msra.mxu0 0
        %906 = vmatprep.subr.bf16.mxu0 0
        %907 = vmatpush1.bf16.msra.mxu0 0
        %908 = vmatprep.subr.bf16.mxu0 0
        %909 = vmatpush1.bf16.msra.mxu0 0
        %910 = vmatprep.subr.bf16.mxu0 0
        %911 = vmatpush1.bf16.msra.mxu0 0
        %912 = vmatprep.subr.bf16.mxu0 0
        %913 = vmatpush1.bf16.msra.mxu0 0
        %914 = vmatprep.subr.bf16.mxu0 0
        %915 = vmatpush1.bf16.msra.mxu0 0
        %916 = vmatprep.subr.bf16.mxu0 0
        %917 = vmatpush1.bf16.msra.mxu0 0
        %918 = vmatprep.subr.bf16.mxu0 0
        %919 = vmatpush1.bf16.msra.mxu0 0
        %920 = vmatprep.subr.bf16.mxu0 0
        %921 = vmatpush1.bf16.msra.mxu0 0
        %922 = vmatprep.subr.bf16.mxu0 0
        %923 = vmatpush1.bf16.msra.mxu0 0
        %924 = vmatprep.subr.bf16.mxu0 0
        %925 = vmatpush1.bf16.msra.mxu0 0
        %926 = vmatprep.subr.bf16.mxu0 0
        %927 = vmatpush1.bf16.msra.mxu0 0
        %928 = vmatprep.subr.bf16.mxu0 0
        %929 = vmatpush1.bf16.msra.mxu0 0
        %930 = vmatprep.mubr.bf16.mxu0 0
        %931 = vmatmul.mubr.bf16.gmra.mrb[0].mxu0 %v896
        %v932 = vpop.f32.mrb[0].mxu0
        %v933 = vadd.f32 %v881, %v932
        %v934 = vpop.f32.mrb[0].mxu0
        %v935 = vpop.f32.mrb[0].mxu0
        %v936 = vpop.f32.mrb[0].mxu0
        %937 = vdwg.mxu0
        %939 = vrot.lane.b32.xlu0 %v933, 120
        %v940 = vpop.permute.xlu0 %939
        %942 = vrot.lane.b32.xlu0 %v933, 112
        %v943 = vpop.permute.xlu0 %942
        %945 = vrot.lane.b32.xlu0 %v933, 104
        %v946 = vpop.permute.xlu0 %945
        %v948 = vpack.c.bf16 %v933, %v933
        %v949 = vpack.c.bf16 %v940, %v940
        %v950 = vpack.c.bf16 %v943, %v943
        %v951 = vpack.c.bf16 %v946, %v946
        %953 = vrot.lane.b32.xlu0 %v948, 96
        %v954 = vpop.permute.xlu0 %953
        %vm955 = vcmask 64512
        %v957 = vsel %vm955, %v948, 0
        %v960 = vsel %vm955, %v954, 0
        %962 = vmatprep.subr.bf16.mxu0 0
        %963 = vmatpush1.bf16.xpose.msra.mxu0 %v960
        %964 = vmatprep.subr.bf16.mxu0 0
        %965 = vmatpush1.bf16.xpose.msra.mxu0 0
        %966 = vmatprep.subr.bf16.mxu0 0
        %967 = vmatpush1.bf16.xpose.msra.mxu0 0
        %968 = vmatprep.subr.bf16.mxu0 0
        %969 = vmatpush1.bf16.xpose.msra.mxu0 0
        %970 = vmatprep.subr.bf16.mxu0 0
        %971 = vmatpush1.bf16.xpose.msra.mxu0 0
        %972 = vmatprep.subr.bf16.mxu0 0
        %973 = vmatpush1.bf16.xpose.msra.mxu0 0
        %974 = vmatprep.subr.bf16.mxu0 0
        %975 = vmatpush1.bf16.xpose.msra.mxu0 0
        %976 = vmatprep.subr.bf16.mxu0 0
        %977 = vmatpush1.bf16.xpose.msra.mxu0 0
        %978 = vmatprep.subr.bf16.mxu0 0
        %979 = vmatpush1.bf16.xpose.msra.mxu0 0
        %980 = vmatprep.subr.bf16.mxu0 0
        %981 = vmatpush1.bf16.xpose.msra.mxu0 0
        %982 = vmatprep.subr.bf16.mxu0 0
        %983 = vmatpush1.bf16.xpose.msra.mxu0 0
        %984 = vmatprep.subr.bf16.mxu0 0
        %985 = vmatpush1.bf16.xpose.msra.mxu0 0
        %986 = vmatprep.subr.bf16.mxu0 0
        %987 = vmatpush1.bf16.xpose.msra.mxu0 0
        %988 = vmatprep.subr.bf16.mxu0 0
        %989 = vmatpush1.bf16.xpose.msra.mxu0 0
        %990 = vmatprep.subr.bf16.mxu0 0
        %991 = vmatpush1.bf16.xpose.msra.mxu0 0
        %992 = vmatprep.subr.bf16.mxu0 0
        %993 = vmatpush1.bf16.xpose.msra.mxu0 0
        %994 = vmatprep.mubr.bf16.mxu0 0
        %995 = vmatmul.mubr.bf16.gmra.mrb[0].mxu0 %v957
        %v996 = vpop.f32.mrb[0].mxu0
        %v997 = vadd.f32 0.0, %v996
        %v998 = vpop.f32.mrb[0].mxu0
        %v999 = vpop.f32.mrb[0].mxu0
        %v1000 = vpop.f32.mrb[0].mxu0
        %1001 = vdwg.mxu0
        %1003 = vrot.lane.b32.xlu0 %v949, 96
        %v1004 = vpop.permute.xlu0 %1003
        %v1006 = vsel %vm955, %v949, 0
        %v1009 = vsel %vm955, %v1004, 0
        %1011 = vmatprep.subr.bf16.mxu0 0
        %1012 = vmatpush1.bf16.xpose.msra.mxu0 %v1009
        %1013 = vmatprep.subr.bf16.mxu0 0
        %1014 = vmatpush1.bf16.xpose.msra.mxu0 0
        %1015 = vmatprep.subr.bf16.mxu0 0
        %1016 = vmatpush1.bf16.xpose.msra.mxu0 0
        %1017 = vmatprep.subr.bf16.mxu0 0
        %1018 = vmatpush1.bf16.xpose.msra.mxu0 0
        %1019 = vmatprep.subr.bf16.mxu0 0
        %1020 = vmatpush1.bf16.xpose.msra.mxu0 0
        %1021 = vmatprep.subr.bf16.mxu0 0
        %1022 = vmatpush1.bf16.xpose.msra.mxu0 0
        %1023 = vmatprep.subr.bf16.mxu0 0
        %1024 = vmatpush1.bf16.xpose.msra.mxu0 0
        %1025 = vmatprep.subr.bf16.mxu0 0
        %1026 = vmatpush1.bf16.xpose.msra.mxu0 0
        %1027 = vmatprep.subr.bf16.mxu0 0
        %1028 = vmatpush1.bf16.xpose.msra.mxu0 0
        %1029 = vmatprep.subr.bf16.mxu0 0
        %1030 = vmatpush1.bf16.xpose.msra.mxu0 0
        %1031 = vmatprep.subr.bf16.mxu0 0
        %1032 = vmatpush1.bf16.xpose.msra.mxu0 0
        %1033 = vmatprep.subr.bf16.mxu0 0
        %1034 = vmatpush1.bf16.xpose.msra.mxu0 0
        %1035 = vmatprep.subr.bf16.mxu0 0
        %1036 = vmatpush1.bf16.xpose.msra.mxu0 0
        %1037 = vmatprep.subr.bf16.mxu0 0
        %1038 = vmatpush1.bf16.xpose.msra.mxu0 0
        %1039 = vmatprep.subr.bf16.mxu0 0
        %1040 = vmatpush1.bf16.xpose.msra.mxu0 0
        %1041 = vmatprep.subr.bf16.mxu0 0
        %1042 = vmatpush1.bf16.xpose.msra.mxu0 0
        %1043 = vmatprep.mubr.bf16.mxu0 0
        %1044 = vmatmul.mubr.bf16.gmra.mrb[0].mxu0 %v1006
        %v1045 = vpop.f32.mrb[0].mxu0
        %v1046 = vadd.f32 0.0, %v1045
        %v1047 = vpop.f32.mrb[0].mxu0
        %v1048 = vpop.f32.mrb[0].mxu0
        %v1049 = vpop.f32.mrb[0].mxu0
        %1050 = vdwg.mxu0
        %1052 = vrot.lane.b32.xlu0 %v950, 96
        %v1053 = vpop.permute.xlu0 %1052
        %v1055 = vsel %vm955, %v950, 0
        %v1058 = vsel %vm955, %v1053, 0
        %1060 = vmatprep.subr.bf16.mxu0 0
        %1061 = vmatpush1.bf16.xpose.msra.mxu0 %v1058
        %1062 = vmatprep.subr.bf16.mxu0 0
        %1063 = vmatpush1.bf16.xpose.msra.mxu0 0
        %1064 = vmatprep.subr.bf16.mxu0 0
        %1065 = vmatpush1.bf16.xpose.msra.mxu0 0
        %1066 = vmatprep.subr.bf16.mxu0 0
        %1067 = vmatpush1.bf16.xpose.msra.mxu0 0
        %1068 = vmatprep.subr.bf16.mxu0 0
        %1069 = vmatpush1.bf16.xpose.msra.mxu0 0
        %1070 = vmatprep.subr.bf16.mxu0 0
        %1071 = vmatpush1.bf16.xpose.msra.mxu0 0
        %1072 = vmatprep.subr.bf16.mxu0 0
        %1073 = vmatpush1.bf16.xpose.msra.mxu0 0
        %1074 = vmatprep.subr.bf16.mxu0 0
        %1075 = vmatpush1.bf16.xpose.msra.mxu0 0
        %1076 = vmatprep.subr.bf16.mxu0 0
        %1077 = vmatpush1.bf16.xpose.msra.mxu0 0
        %1078 = vmatprep.subr.bf16.mxu0 0
        %1079 = vmatpush1.bf16.xpose.msra.mxu0 0
        %1080 = vmatprep.subr.bf16.mxu0 0
        %1081 = vmatpush1.bf16.xpose.msra.mxu0 0
        %1082 = vmatprep.subr.bf16.mxu0 0
        %1083 = vmatpush1.bf16.xpose.msra.mxu0 0
        %1084 = vmatprep.subr.bf16.mxu0 0
        %1085 = vmatpush1.bf16.xpose.msra.mxu0 0
        %1086 = vmatprep.subr.bf16.mxu0 0
        %1087 = vmatpush1.bf16.xpose.msra.mxu0 0
        %1088 = vmatprep.subr.bf16.mxu0 0
        %1089 = vmatpush1.bf16.xpose.msra.mxu0 0
        %1090 = vmatprep.subr.bf16.mxu0 0
        %1091 = vmatpush1.bf16.xpose.msra.mxu0 0
        %1092 = vmatprep.mubr.bf16.mxu0 0
        %1093 = vmatmul.mubr.bf16.gmra.mrb[0].mxu0 %v1055
        %v1094 = vpop.f32.mrb[0].mxu0
        %v1095 = vadd.f32 0.0, %v1094
        %v1096 = vpop.f32.mrb[0].mxu0
        %v1097 = vpop.f32.mrb[0].mxu0
        %v1098 = vpop.f32.mrb[0].mxu0
        %1099 = vdwg.mxu0
        %1101 = vrot.lane.b32.xlu0 %v951, 96
        %v1102 = vpop.permute.xlu0 %1101
        %v1104 = vsel %vm955, %v951, 0
        %v1107 = vsel %vm955, %v1102, 0
        %1109 = vmatprep.subr.bf16.mxu0 0
        %1110 = vmatpush1.bf16.xpose.msra.mxu0 %v1107
        %1111 = vmatprep.subr.bf16.mxu0 0
        %1112 = vmatpush1.bf16.xpose.msra.mxu0 0
        %1113 = vmatprep.subr.bf16.mxu0 0
        %1114 = vmatpush1.bf16.xpose.msra.mxu0 0
        %1115 = vmatprep.subr.bf16.mxu0 0
        %1116 = vmatpush1.bf16.xpose.msra.mxu0 0
        %1117 = vmatprep.subr.bf16.mxu0 0
        %1118 = vmatpush1.bf16.xpose.msra.mxu0 0
        %1119 = vmatprep.subr.bf16.mxu0 0
        %1120 = vmatpush1.bf16.xpose.msra.mxu0 0
        %1121 = vmatprep.subr.bf16.mxu0 0
        %1122 = vmatpush1.bf16.xpose.msra.mxu0 0
        %1123 = vmatprep.subr.bf16.mxu0 0
        %1124 = vmatpush1.bf16.xpose.msra.mxu0 0
        %1125 = vmatprep.subr.bf16.mxu0 0
        %1126 = vmatpush1.bf16.xpose.msra.mxu0 0
        %1127 = vmatprep.subr.bf16.mxu0 0
        %1128 = vmatpush1.bf16.xpose.msra.mxu0 0
        %1129 = vmatprep.subr.bf16.mxu0 0
        %1130 = vmatpush1.bf16.xpose.msra.mxu0 0
        %1131 = vmatprep.subr.bf16.mxu0 0
        %1132 = vmatpush1.bf16.xpose.msra.mxu0 0
        %1133 = vmatprep.subr.bf16.mxu0 0
        %1134 = vmatpush1.bf16.xpose.msra.mxu0 0
        %1135 = vmatprep.subr.bf16.mxu0 0
        %1136 = vmatpush1.bf16.xpose.msra.mxu0 0
        %1137 = vmatprep.subr.bf16.mxu0 0
        %1138 = vmatpush1.bf16.xpose.msra.mxu0 0
        %1139 = vmatprep.subr.bf16.mxu0 0
        %1140 = vmatpush1.bf16.xpose.msra.mxu0 0
        %1141 = vmatprep.mubr.bf16.mxu0 0
        %1142 = vmatmul.mubr.bf16.gmra.mrb[0].mxu0 %v1104
        %v1143 = vpop.f32.mrb[0].mxu0
        %v1144 = vadd.f32 0.0, %v1143
        %v1145 = vpop.f32.mrb[0].mxu0
        %v1146 = vpop.f32.mrb[0].mxu0
        %v1147 = vpop.f32.mrb[0].mxu0
        %1148 = vdwg.mxu0
        %v1149 = vmul.f32 %v997, 0.35355338
        %v1150 = vmul.f32 %v1046, 0.35355338
        %v1151 = vmul.f32 %v1095, 0.35355338
        %v1152 = vmul.f32 %v1144, 0.35355338
        %v1153 = vld [vmem:[#allocation3] sm:$0xff]
        %v1154 = vadd.f32 %v1149, %v1153
        %v1155 = vadd.f32 %v1150, %v1153
        %v1156 = vadd.f32 %v1151, %v1153
        %v1157 = vadd.f32 %v1152, %v1153
        %v1158 = vsel %vm955, %v1154, -inf
        %1159 = vmax.xlane.f32.xlu0 %v1158
        %v1160 = vpop.xlane.xlu0 %1159
        %v1161 = vsel %vm955, %v1155, -inf
        %1162 = vmax.xlane.f32.xlu0 %v1161
        %v1163 = vpop.xlane.xlu0 %1162
        %v1164 = vsel %vm955, %v1156, -inf
        %1165 = vmax.xlane.f32.xlu0 %v1164
        %v1166 = vpop.xlane.xlu0 %1165
        %v1167 = vsel %vm955, %v1157, -inf
        %1168 = vmax.xlane.f32.xlu0 %v1167
        %v1169 = vpop.xlane.xlu0 %1168
        %v1170 = vsub.f32 %v1154, %v1160
        %v1171 = vsub.f32 %v1155, %v1163
        %v1172 = vsub.f32 %v1156, %v1166
        %v1173 = vsub.f32 %v1157, %v1169
        %v1174 = vmul.f32 %v1170, 1.442695
        %v1175 = vpow.pop %v1174
        %v1176 = vmul.f32 %v1171, 1.442695
        %v1177 = vpow.pop %v1176
        %v1178 = vmul.f32 %v1172, 1.442695
        %v1179 = vpow.pop %v1178
        %v1180 = vmul.f32 %v1173, 1.442695
        %v1181 = vpow.pop %v1180
        %v1182 = vsel %vm955, %v1175, 0.0
        %1183 = vadd.xlane.f32.xlu0 %v1182
        %v1184 = vpop.xlane.xlu0 %1183
        %v1185 = vsel %vm955, %v1177, 0.0
        %1186 = vadd.xlane.f32.xlu0 %v1185
        %v1187 = vpop.xlane.xlu0 %1186
        %v1188 = vsel %vm955, %v1179, 0.0
        %1189 = vadd.xlane.f32.xlu0 %v1188
        %v1190 = vpop.xlane.xlu0 %1189
        %v1191 = vsel %vm955, %v1181, 0.0
        %1192 = vadd.xlane.f32.xlu0 %v1191
        %v1193 = vpop.xlane.xlu0 %1192
        %v1194 = vrcp.pop %v1184
        %v1195 = vrcp.pop %v1187
        %v1196 = vrcp.pop %v1190
        %v1197 = vrcp.pop %v1193
        %v1198 = vmul.f32 %v1175, %v1194
        %v1199 = vmul.f32 %v1177, %v1195
        %v1200 = vmul.f32 %v1179, %v1196
        %v1201 = vmul.f32 %v1181, %v1197
        %v1202 = vpack.c.bf16 %v1198, %v1198
        %v1203 = vpack.c.bf16 %v1199, %v1199
        %v1204 = vpack.c.bf16 %v1200, %v1200
        %v1205 = vpack.c.bf16 %v1201, %v1201
        %1206 = vrot.lane.b32.xlu0 %v948, 64
        %v1207 = vpop.permute.xlu0 %1206
        %v1209 = vsel %vm955, %v1202, 0
        %vm1211 = vcmask 1043456
        %v1213 = vsel %vm1211, %v1207, 0
        %1215 = vmatprep.subr.bf16.mxu0 0
        %1216 = vmatpush1.bf16.msra.mxu0 %v1213
        %1217 = vmatprep.subr.bf16.mxu0 0
        %1218 = vmatpush1.bf16.msra.mxu0 0
        %1219 = vmatprep.subr.bf16.mxu0 0
        %1220 = vmatpush1.bf16.msra.mxu0 0
        %1221 = vmatprep.subr.bf16.mxu0 0
        %1222 = vmatpush1.bf16.msra.mxu0 0
        %1223 = vmatprep.subr.bf16.mxu0 0
        %1224 = vmatpush1.bf16.msra.mxu0 0
        %1225 = vmatprep.subr.bf16.mxu0 0
        %1226 = vmatpush1.bf16.msra.mxu0 0
        %1227 = vmatprep.subr.bf16.mxu0 0
        %1228 = vmatpush1.bf16.msra.mxu0 0
        %1229 = vmatprep.subr.bf16.mxu0 0
        %1230 = vmatpush1.bf16.msra.mxu0 0
        %1231 = vmatprep.subr.bf16.mxu0 0
        %1232 = vmatpush1.bf16.msra.mxu0 0
        %1233 = vmatprep.subr.bf16.mxu0 0
        %1234 = vmatpush1.bf16.msra.mxu0 0
        %1235 = vmatprep.subr.bf16.mxu0 0
        %1236 = vmatpush1.bf16.msra.mxu0 0
        %1237 = vmatprep.subr.bf16.mxu0 0
        %1238 = vmatpush1.bf16.msra.mxu0 0
        %1239 = vmatprep.subr.bf16.mxu0 0
        %1240 = vmatpush1.bf16.msra.mxu0 0
        %1241 = vmatprep.subr.bf16.mxu0 0
        %1242 = vmatpush1.bf16.msra.mxu0 0
        %1243 = vmatprep.subr.bf16.mxu0 0
        %1244 = vmatpush1.bf16.msra.mxu0 0
        %1245 = vmatprep.subr.bf16.mxu0 0
        %1246 = vmatpush1.bf16.msra.mxu0 0
        %1247 = vmatprep.mubr.bf16.mxu0 0
        %1248 = vmatmul.mubr.bf16.gmra.mrb[0].mxu0 %v1209
        %v1249 = vpop.f32.mrb[0].mxu0
        %v1250 = vadd.f32 0.0, %v1249
        %v1251 = vpop.f32.mrb[0].mxu0
        %v1252 = vpop.f32.mrb[0].mxu0
        %v1253 = vpop.f32.mrb[0].mxu0
        %1254 = vdwg.mxu0
        %1255 = vrot.lane.b32.xlu0 %v949, 64
        %v1256 = vpop.permute.xlu0 %1255
        %v1258 = vsel %vm955, %v1203, 0
        %v1261 = vsel %vm1211, %v1256, 0
        %1263 = vmatprep.subr.bf16.mxu0 0
        %1264 = vmatpush1.bf16.msra.mxu0 %v1261
        %1265 = vmatprep.subr.bf16.mxu0 0
        %1266 = vmatpush1.bf16.msra.mxu0 0
        %1267 = vmatprep.subr.bf16.mxu0 0
        %1268 = vmatpush1.bf16.msra.mxu0 0
        %1269 = vmatprep.subr.bf16.mxu0 0
        %1270 = vmatpush1.bf16.msra.mxu0 0
        %1271 = vmatprep.subr.bf16.mxu0 0
        %1272 = vmatpush1.bf16.msra.mxu0 0
        %1273 = vmatprep.subr.bf16.mxu0 0
        %1274 = vmatpush1.bf16.msra.mxu0 0
        %1275 = vmatprep.subr.bf16.mxu0 0
        %1276 = vmatpush1.bf16.msra.mxu0 0
        %1277 = vmatprep.subr.bf16.mxu0 0
        %1278 = vmatpush1.bf16.msra.mxu0 0
        %1279 = vmatprep.subr.bf16.mxu0 0
        %1280 = vmatpush1.bf16.msra.mxu0 0
        %1281 = vmatprep.subr.bf16.mxu0 0
        %1282 = vmatpush1.bf16.msra.mxu0 0
        %1283 = vmatprep.subr.bf16.mxu0 0
        %1284 = vmatpush1.bf16.msra.mxu0 0
        %1285 = vmatprep.subr.bf16.mxu0 0
        %1286 = vmatpush1.bf16.msra.mxu0 0
        %1287 = vmatprep.subr.bf16.mxu0 0
        %1288 = vmatpush1.bf16.msra.mxu0 0
        %1289 = vmatprep.subr.bf16.mxu0 0
        %1290 = vmatpush1.bf16.msra.mxu0 0
        %1291 = vmatprep.subr.bf16.mxu0 0
        %1292 = vmatpush1.bf16.msra.mxu0 0
        %1293 = vmatprep.subr.bf16.mxu0 0
        %1294 = vmatpush1.bf16.msra.mxu0 0
        %1295 = vmatprep.mubr.bf16.mxu0 0
        %1296 = vmatmul.mubr.bf16.gmra.mrb[0].mxu0 %v1258
        %v1297 = vpop.f32.mrb[0].mxu0
        %v1298 = vadd.f32 0.0, %v1297
        %v1299 = vpop.f32.mrb[0].mxu0
        %v1300 = vpop.f32.mrb[0].mxu0
        %v1301 = vpop.f32.mrb[0].mxu0
        %1302 = vdwg.mxu0
        %1303 = vrot.lane.b32.xlu0 %v950, 64
        %v1304 = vpop.permute.xlu0 %1303
        %v1306 = vsel %vm955, %v1204, 0
        %v1309 = vsel %vm1211, %v1304, 0
        %1311 = vmatprep.subr.bf16.mxu0 0
        %1312 = vmatpush1.bf16.msra.mxu0 %v1309
        %1313 = vmatprep.subr.bf16.mxu0 0
        %1314 = vmatpush1.bf16.msra.mxu0 0
        %1315 = vmatprep.subr.bf16.mxu0 0
        %1316 = vmatpush1.bf16.msra.mxu0 0
        %1317 = vmatprep.subr.bf16.mxu0 0
        %1318 = vmatpush1.bf16.msra.mxu0 0
        %1319 = vmatprep.subr.bf16.mxu0 0
        %1320 = vmatpush1.bf16.msra.mxu0 0
        %1321 = vmatprep.subr.bf16.mxu0 0
        %1322 = vmatpush1.bf16.msra.mxu0 0
        %1323 = vmatprep.subr.bf16.mxu0 0
        %1324 = vmatpush1.bf16.msra.mxu0 0
        %1325 = vmatprep.subr.bf16.mxu0 0
        %1326 = vmatpush1.bf16.msra.mxu0 0
        %1327 = vmatprep.subr.bf16.mxu0 0
        %1328 = vmatpush1.bf16.msra.mxu0 0
        %1329 = vmatprep.subr.bf16.mxu0 0
        %1330 = vmatpush1.bf16.msra.mxu0 0
        %1331 = vmatprep.subr.bf16.mxu0 0
        %1332 = vmatpush1.bf16.msra.mxu0 0
        %1333 = vmatprep.subr.bf16.mxu0 0
        %1334 = vmatpush1.bf16.msra.mxu0 0
        %1335 = vmatprep.subr.bf16.mxu0 0
        %1336 = vmatpush1.bf16.msra.mxu0 0
        %1337 = vmatprep.subr.bf16.mxu0 0
        %1338 = vmatpush1.bf16.msra.mxu0 0
        %1339 = vmatprep.subr.bf16.mxu0 0
        %1340 = vmatpush1.bf16.msra.mxu0 0
        %1341 = vmatprep.subr.bf16.mxu0 0
        %1342 = vmatpush1.bf16.msra.mxu0 0
        %1343 = vmatprep.mubr.bf16.mxu0 0
        %1344 = vmatmul.mubr.bf16.gmra.mrb[0].mxu0 %v1306
        %v1345 = vpop.f32.mrb[0].mxu0
        %v1346 = vadd.f32 0.0, %v1345
        %v1347 = vpop.f32.mrb[0].mxu0
        %v1348 = vpop.f32.mrb[0].mxu0
        %v1349 = vpop.f32.mrb[0].mxu0
        %1350 = vdwg.mxu0
        %1351 = vrot.lane.b32.xlu0 %v951, 64
        %v1352 = vpop.permute.xlu0 %1351
        %v1354 = vsel %vm955, %v1205, 0
        %v1357 = vsel %vm1211, %v1352, 0
        %1359 = vmatprep.subr.bf16.mxu0 0
        %1360 = vmatpush1.bf16.msra.mxu0 %v1357
        %1361 = vmatprep.subr.bf16.mxu0 0
        %1362 = vmatpush1.bf16.msra.mxu0 0
        %1363 = vmatprep.subr.bf16.mxu0 0
        %1364 = vmatpush1.bf16.msra.mxu0 0
        %1365 = vmatprep.subr.bf16.mxu0 0
        %1366 = vmatpush1.bf16.msra.mxu0 0
        %1367 = vmatprep.subr.bf16.mxu0 0
        %1368 = vmatpush1.bf16.msra.mxu0 0
        %1369 = vmatprep.subr.bf16.mxu0 0
        %1370 = vmatpush1.bf16.msra.mxu0 0
        %1371 = vmatprep.subr.bf16.mxu0 0
        %1372 = vmatpush1.bf16.msra.mxu0 0
        %1373 = vmatprep.subr.bf16.mxu0 0
        %1374 = vmatpush1.bf16.msra.mxu0 0
        %1375 = vmatprep.subr.bf16.mxu0 0
        %1376 = vmatpush1.bf16.msra.mxu0 0
        %1377 = vmatprep.subr.bf16.mxu0 0
        %1378 = vmatpush1.bf16.msra.mxu0 0
        %1379 = vmatprep.subr.bf16.mxu0 0
        %1380 = vmatpush1.bf16.msra.mxu0 0
        %1381 = vmatprep.subr.bf16.mxu0 0
        %1382 = vmatpush1.bf16.msra.mxu0 0
        %1383 = vmatprep.subr.bf16.mxu0 0
        %1384 = vmatpush1.bf16.msra.mxu0 0
        %1385 = vmatprep.subr.bf16.mxu0 0
        %1386 = vmatpush1.bf16.msra.mxu0 0
        %1387 = vmatprep.subr.bf16.mxu0 0
        %1388 = vmatpush1.bf16.msra.mxu0 0
        %1389 = vmatprep.subr.bf16.mxu0 0
        %1390 = vmatpush1.bf16.msra.mxu0 0
        %1391 = vmatprep.mubr.bf16.mxu0 0
        %1392 = vmatmul.mubr.bf16.gmra.mrb[0].mxu0 %v1354
        %v1393 = vpop.f32.mrb[0].mxu0
        %v1394 = vadd.f32 0.0, %v1393
        %v1395 = vpop.f32.mrb[0].mxu0
        %v1396 = vpop.f32.mrb[0].mxu0
        %v1397 = vpop.f32.mrb[0].mxu0
        %1398 = vdwg.mxu0
        %v1399 = vpack.c.bf16 %v1250, %v1250
        %v1400 = vld [vmem:[%s772] sm:$0xf]
        %v1401 = vpack.c.bf16 %v1298, %v1298
        %s1402 = scalar_lea.vmem %s772, 4
        %v1403 = vld [vmem:[%s1402] sm:$0xf]
        %v1405 = vsel %vm955, %v1401, 0
        %v1408 = vsel %vm1211, %v1403, 0
        %1410 = vmatprep.subr.bf16.mxu0 0
        %1411 = vmatpush1.bf16.msra.mxu0 %v1408
        %1412 = vmatprep.subr.bf16.mxu0 0
        %1413 = vmatpush1.bf16.msra.mxu0 0
        %1414 = vmatprep.subr.bf16.mxu0 0
        %1415 = vmatpush1.bf16.msra.mxu0 0
        %1416 = vmatprep.subr.bf16.mxu0 0
        %1417 = vmatpush1.bf16.msra.mxu0 0
        %1418 = vmatprep.subr.bf16.mxu0 0
        %1419 = vmatpush1.bf16.msra.mxu0 0
        %1420 = vmatprep.subr.bf16.mxu0 0
        %1421 = vmatpush1.bf16.msra.mxu0 0
        %1422 = vmatprep.subr.bf16.mxu0 0
        %1423 = vmatpush1.bf16.msra.mxu0 0
        %1424 = vmatprep.subr.bf16.mxu0 0
        %1425 = vmatpush1.bf16.msra.mxu0 0
        %1426 = vmatprep.subr.bf16.mxu0 0
        %1427 = vmatpush1.bf16.msra.mxu0 0
        %1428 = vmatprep.subr.bf16.mxu0 0
        %1429 = vmatpush1.bf16.msra.mxu0 0
        %1430 = vmatprep.subr.bf16.mxu0 0
        %1431 = vmatpush1.bf16.msra.mxu0 0
        %1432 = vmatprep.subr.bf16.mxu0 0
        %1433 = vmatpush1.bf16.msra.mxu0 0
        %1434 = vmatprep.subr.bf16.mxu0 0
        %1435 = vmatpush1.bf16.msra.mxu0 0
        %1436 = vmatprep.subr.bf16.mxu0 0
        %1437 = vmatpush1.bf16.msra.mxu0 0
        %1438 = vmatprep.subr.bf16.mxu0 0
        %1439 = vmatpush1.bf16.msra.mxu0 0
        %1440 = vmatprep.subr.bf16.mxu0 0
        %1441 = vmatpush1.bf16.msra.mxu0 0
        %1442 = vmatprep.mubr.bf16.mxu0 0
        %1443 = vmatmul.mubr.bf16.gmra.mrb[0].mxu0 %v1405
        %v1444 = vpop.f32.mrb[0].mxu0
        %v1445 = vadd.f32 0.0, %v1444
        %v1446 = vpop.f32.mrb[0].mxu0
        %v1447 = vpop.f32.mrb[0].mxu0
        %v1448 = vpop.f32.mrb[0].mxu0
        %1449 = vdwg.mxu0
        %v1451 = vsel %vm955, %v1399, 0
        %v1454 = vsel %vm1211, %v1400, 0
        %1456 = vmatprep.subr.bf16.mxu0 0
        %1457 = vmatpush1.bf16.msra.mxu0 %v1454
        %1458 = vmatprep.subr.bf16.mxu0 0
        %1459 = vmatpush1.bf16.msra.mxu0 0
        %1460 = vmatprep.subr.bf16.mxu0 0
        %1461 = vmatpush1.bf16.msra.mxu0 0
        %1462 = vmatprep.subr.bf16.mxu0 0
        %1463 = vmatpush1.bf16.msra.mxu0 0
        %1464 = vmatprep.subr.bf16.mxu0 0
        %1465 = vmatpush1.bf16.msra.mxu0 0
        %1466 = vmatprep.subr.bf16.mxu0 0
        %1467 = vmatpush1.bf16.msra.mxu0 0
        %1468 = vmatprep.subr.bf16.mxu0 0
        %1469 = vmatpush1.bf16.msra.mxu0 0
        %1470 = vmatprep.subr.bf16.mxu0 0
        %1471 = vmatpush1.bf16.msra.mxu0 0
        %1472 = vmatprep.subr.bf16.mxu0 0
        %1473 = vmatpush1.bf16.msra.mxu0 0
        %1474 = vmatprep.subr.bf16.mxu0 0
        %1475 = vmatpush1.bf16.msra.mxu0 0
        %1476 = vmatprep.subr.bf16.mxu0 0
        %1477 = vmatpush1.bf16.msra.mxu0 0
        %1478 = vmatprep.subr.bf16.mxu0 0
        %1479 = vmatpush1.bf16.msra.mxu0 0
        %1480 = vmatprep.subr.bf16.mxu0 0
        %1481 = vmatpush1.bf16.msra.mxu0 0
        %1482 = vmatprep.subr.bf16.mxu0 0
        %1483 = vmatpush1.bf16.msra.mxu0 0
        %1484 = vmatprep.subr.bf16.mxu0 0
        %1485 = vmatpush1.bf16.msra.mxu0 0
        %1486 = vmatprep.subr.bf16.mxu0 0
        %1487 = vmatpush1.bf16.msra.mxu0 0
        %1488 = vmatprep.mubr.bf16.mxu0 0
        %1489 = vmatmul.mubr.bf16.gmra.mrb[0].mxu0 %v1451
        %v1490 = vpop.f32.mrb[0].mxu0
        %v1491 = vadd.f32 %v1445, %v1490
        %v1492 = vpop.f32.mrb[0].mxu0
        %v1493 = vpop.f32.mrb[0].mxu0
        %v1494 = vpop.f32.mrb[0].mxu0
        %1495 = vdwg.mxu0
        %v1496 = vpack.c.bf16 %v1346, %v1346
        %s1497 = scalar_lea.vmem %s772, 8
        %v1498 = vld [vmem:[%s1497] sm:$0xf]
        %v1500 = vsel %vm955, %v1496, 0
        %v1503 = vsel %vm1211, %v1498, 0
        %1505 = vmatprep.subr.bf16.mxu0 0
        %1506 = vmatpush1.bf16.msra.mxu0 %v1503
        %1507 = vmatprep.subr.bf16.mxu0 0
        %1508 = vmatpush1.bf16.msra.mxu0 0
        %1509 = vmatprep.subr.bf16.mxu0 0
        %1510 = vmatpush1.bf16.msra.mxu0 0
        %1511 = vmatprep.subr.bf16.mxu0 0
        %1512 = vmatpush1.bf16.msra.mxu0 0
        %1513 = vmatprep.subr.bf16.mxu0 0
        %1514 = vmatpush1.bf16.msra.mxu0 0
        %1515 = vmatprep.subr.bf16.mxu0 0
        %1516 = vmatpush1.bf16.msra.mxu0 0
        %1517 = vmatprep.subr.bf16.mxu0 0
        %1518 = vmatpush1.bf16.msra.mxu0 0
        %1519 = vmatprep.subr.bf16.mxu0 0
        %1520 = vmatpush1.bf16.msra.mxu0 0
        %1521 = vmatprep.subr.bf16.mxu0 0
        %1522 = vmatpush1.bf16.msra.mxu0 0
        %1523 = vmatprep.subr.bf16.mxu0 0
        %1524 = vmatpush1.bf16.msra.mxu0 0
        %1525 = vmatprep.subr.bf16.mxu0 0
        %1526 = vmatpush1.bf16.msra.mxu0 0
        %1527 = vmatprep.subr.bf16.mxu0 0
        %1528 = vmatpush1.bf16.msra.mxu0 0
        %1529 = vmatprep.subr.bf16.mxu0 0
        %1530 = vmatpush1.bf16.msra.mxu0 0
        %1531 = vmatprep.subr.bf16.mxu0 0
        %1532 = vmatpush1.bf16.msra.mxu0 0
        %1533 = vmatprep.subr.bf16.mxu0 0
        %1534 = vmatpush1.bf16.msra.mxu0 0
        %1535 = vmatprep.subr.bf16.mxu0 0
        %1536 = vmatpush1.bf16.msra.mxu0 0
        %1537 = vmatprep.mubr.bf16.mxu0 0
        %1538 = vmatmul.mubr.bf16.gmra.mrb[0].mxu0 %v1500
        %v1539 = vpop.f32.mrb[0].mxu0
        %v1540 = vadd.f32 0.0, %v1539
        %v1541 = vpop.f32.mrb[0].mxu0
        %v1542 = vpop.f32.mrb[0].mxu0
        %v1543 = vpop.f32.mrb[0].mxu0
        %1544 = vdwg.mxu0
        %v1545 = vadd.f32 %v1491, %v1540
        %v1546 = vpack.c.bf16 %v1394, %v1394
        %s1547 = scalar_lea.vmem %s772, 12
        %v1548 = vld [vmem:[%s1547] sm:$0xf]
        %v1550 = vsel %vm955, %v1546, 0
        %v1553 = vsel %vm1211, %v1548, 0
        %1555 = vmatprep.subr.bf16.mxu0 0
        %1556 = vmatpush1.bf16.msra.mxu0 %v1553
        %1557 = vmatprep.subr.bf16.mxu0 0
        %1558 = vmatpush1.bf16.msra.mxu0 0
        %1559 = vmatprep.subr.bf16.mxu0 0
        %1560 = vmatpush1.bf16.msra.mxu0 0
        %1561 = vmatprep.subr.bf16.mxu0 0
        %1562 = vmatpush1.bf16.msra.mxu0 0
        %1563 = vmatprep.subr.bf16.mxu0 0
        %1564 = vmatpush1.bf16.msra.mxu0 0
        %1565 = vmatprep.subr.bf16.mxu0 0
        %1566 = vmatpush1.bf16.msra.mxu0 0
        %1567 = vmatprep.subr.bf16.mxu0 0
        %1568 = vmatpush1.bf16.msra.mxu0 0
        %1569 = vmatprep.subr.bf16.mxu0 0
        %1570 = vmatpush1.bf16.msra.mxu0 0
        %1571 = vmatprep.subr.bf16.mxu0 0
        %1572 = vmatpush1.bf16.msra.mxu0 0
        %1573 = vmatprep.subr.bf16.mxu0 0
        %1574 = vmatpush1.bf16.msra.mxu0 0
        %1575 = vmatprep.subr.bf16.mxu0 0
        %1576 = vmatpush1.bf16.msra.mxu0 0
        %1577 = vmatprep.subr.bf16.mxu0 0
        %1578 = vmatpush1.bf16.msra.mxu0 0
        %1579 = vmatprep.subr.bf16.mxu0 0
        %1580 = vmatpush1.bf16.msra.mxu0 0
        %1581 = vmatprep.subr.bf16.mxu0 0
        %1582 = vmatpush1.bf16.msra.mxu0 0
        %1583 = vmatprep.subr.bf16.mxu0 0
        %1584 = vmatpush1.bf16.msra.mxu0 0
        %1585 = vmatprep.subr.bf16.mxu0 0
        %1586 = vmatpush1.bf16.msra.mxu0 0
        %1587 = vmatprep.mubr.bf16.mxu0 0
        %1588 = vmatmul.mubr.bf16.gmra.mrb[0].mxu0 %v1550
        %v1589 = vpop.f32.mrb[0].mxu0
        %v1590 = vadd.f32 0.0, %v1589
        %v1591 = vpop.f32.mrb[0].mxu0
        %v1592 = vpop.f32.mrb[0].mxu0
        %v1593 = vpop.f32.mrb[0].mxu0
        %1594 = vdwg.mxu0
        %v1595 = vadd.f32 %v1545, %v1590
        %v1596 = vadd.f32 %v839, %v1595
        %v1597 = vld [vmem:[%s775] sm:$0x1]
        %v1599 = vlaneseq
        %v1600 = vshrl.u32 %v1599, 7
        %v1601 = vsub.s32 0, %v1600
        %v1602 = vrot.slane %v1597, %v1601
        %v1604 = vadd.f32 %v1596, %v1602
        %v1605 = vld [vmem:[%s778] sm:$0x1]
        %v1606 = vld [vmem:[%s781] sm:$0x1]
        %v1607 = vsel %vm842, %v1604, 0.0
        %1608 = vadd.xlane.f32.xlu0 %v1607
        %v1609 = vpop.xlane.xlu0 %1608
        %v1610 = vmul.f32 %v1609, %v846
        %v1611 = vsub.f32 %v1604, %v1610
        %v1612 = vmul.f32 %v1611, %v1611
        %v1613 = vsel %vm842, %v1612, 0.0
        %1614 = vadd.xlane.f32.xlu0 %v1613
        %v1615 = vpop.xlane.xlu0 %1614
        %v1616 = vmul.f32 %v1615, %v846
        %v1617 = vadd.f32 %v1616, 1e-05
        %v1618 = vrsqrt.pop %v1617
        %v1619 = vmul.f32 %v1611, %v1618
        %v1621 = vlaneseq
        %v1622 = vshrl.u32 %v1621, 7
        %v1623 = vsub.s32 0, %v1622
        %v1624 = vrot.slane %v1605, %v1623
        %v1626 = vmul.f32 %v1619, %v1624
        %v1628 = vlaneseq
        %v1629 = vshrl.u32 %v1628, 7
        %v1630 = vsub.s32 0, %v1629
        %v1631 = vrot.slane %v1606, %v1630
        %v1633 = vadd.f32 %v1626, %v1631
        %v1634 = vpack.c.bf16 %v1633, %v1633
        %v1635 = vld [vmem:[%s786] sm:$0xf]
        %v1636 = vld [vmem:[%s786 + $0x4] sm:$0xf]
        %v1637 = vld [vmem:[%s786 + $0x8] sm:$0xf]
        %v1638 = vld [vmem:[%s786 + $0xc] sm:$0xf]
        %v1639 = vld [vmem:[%s789] sm:$0x1]
        %v1641 = vlaneseq
        %v1642 = vshrl.u32 %v1641, 7
        %v1643 = vsub.s32 0, %v1642
        %v1644 = vrot.slane %v1639, %v1643
        %v1650 = vunpack.c.l.b16 %v1635
        %v1651 = vunpack.c.l.b16 %v1636
        %v1652 = vunpack.c.l.b16 %v1637
        %v1653 = vunpack.c.l.b16 %v1638
        %v1654 = vpack.c.b16 %v1651, %v1650
        %v1655 = vpack.c.b16 %v1653, %v1652
        %v1659 = vsel %vm842, %v1634, 0
        %1661 = vmatprep.subr.bf16.mxu0 0
        %1662 = vmatpush1.bf16.msra.mxu0 %v1654
        %1663 = vmatprep.subr.bf16.mxu0 0
        %1664 = vmatpush1.bf16.msra.mxu0 %v1655
        %1665 = vmatprep.subr.bf16.mxu0 0
        %1666 = vmatpush1.bf16.msra.mxu0 0
        %1667 = vmatprep.subr.bf16.mxu0 0
        %1668 = vmatpush1.bf16.msra.mxu0 0
        %1669 = vmatprep.subr.bf16.mxu0 0
        %1670 = vmatpush1.bf16.msra.mxu0 0
        %1671 = vmatprep.subr.bf16.mxu0 0
        %1672 = vmatpush1.bf16.msra.mxu0 0
        %1673 = vmatprep.subr.bf16.mxu0 0
        %1674 = vmatpush1.bf16.msra.mxu0 0
        %1675 = vmatprep.subr.bf16.mxu0 0
        %1676 = vmatpush1.bf16.msra.mxu0 0
        %1677 = vmatprep.subr.bf16.mxu0 0
        %1678 = vmatpush1.bf16.msra.mxu0 0
        %1679 = vmatprep.subr.bf16.mxu0 0
        %1680 = vmatpush1.bf16.msra.mxu0 0
        %1681 = vmatprep.subr.bf16.mxu0 0
        %1682 = vmatpush1.bf16.msra.mxu0 0
        %1683 = vmatprep.subr.bf16.mxu0 0
        %1684 = vmatpush1.bf16.msra.mxu0 0
        %1685 = vmatprep.subr.bf16.mxu0 0
        %1686 = vmatpush1.bf16.msra.mxu0 0
        %1687 = vmatprep.subr.bf16.mxu0 0
        %1688 = vmatpush1.bf16.msra.mxu0 0
        %1689 = vmatprep.subr.bf16.mxu0 0
        %1690 = vmatpush1.bf16.msra.mxu0 0
        %1691 = vmatprep.subr.bf16.mxu0 0
        %1692 = vmatpush1.bf16.msra.mxu0 0
        %1693 = vmatprep.mubr.bf16.mxu0 0
        %1694 = vmatmul.mubr.bf16.gmra.mrb[0].mxu0 %v1659
        %v1695 = vpop.f32.mrb[0].mxu0
        %v1696 = vadd.f32 %v1644, %v1695
        %v1697 = vpop.f32.mrb[0].mxu0
        %v1698 = vpop.f32.mrb[0].mxu0
        %v1699 = vpop.f32.mrb[0].mxu0
        %1700 = vdwg.mxu0
        %v1701 = vmul.f32 %v1696, 0.5
        %v1702 = vmul.f32 %v1696, %v1696
        %v1703 = vmul.f32 %v1702, %v1696
        %v1704 = vmul.f32 %v1703, 0.044715
        %v1705 = vadd.f32 %v1696, %v1704
        %v1706 = vmul.f32 %v1705, 0.7978846
        %v1707 = vtanh.pop %v1706
        %v1708 = vadd.f32 %v1707, 1.0
        %v1709 = vmul.f32 %v1701, %v1708
        %v1710 = vpack.c.bf16 %v1709, %v1709
        %v1711 = vld [vmem:[%s794] sm:$0xf]
        %v1712 = vld [vmem:[%s794 + $0x4] sm:$0xf]
        %v1713 = vld [vmem:[%s794 + $0x8] sm:$0xf]
        %v1714 = vld [vmem:[%s794 + $0xc] sm:$0xf]
        %v1715 = vld [vmem:[%s794 + $0x10] sm:$0xf]
        %v1716 = vld [vmem:[%s794 + $0x14] sm:$0xf]
        %v1717 = vld [vmem:[%s794 + $0x18] sm:$0xf]
        %v1718 = vld [vmem:[%s794 + $0x1c] sm:$0xf]
        %v1719 = vld [vmem:[%s794 + $0x20] sm:$0xf]
        %v1720 = vld [vmem:[%s794 + $0x24] sm:$0xf]
        %v1721 = vld [vmem:[%s794 + $0x28] sm:$0xf]
        %v1722 = vld [vmem:[%s794 + $0x2c] sm:$0xf]
        %v1723 = vld [vmem:[%s794 + $0x30] sm:$0xf]
        %v1724 = vld [vmem:[%s794 + $0x34] sm:$0xf]
        %v1725 = vld [vmem:[%s794 + $0x38] sm:$0xf]
        %v1726 = vld [vmem:[%s794 + $0x3c] sm:$0xf]
        %v1727 = vld [vmem:[%s797] sm:$0x1]
        %v1729 = vlaneseq
        %v1730 = vshrl.u32 %v1729, 7
        %v1731 = vsub.s32 0, %v1730
        %v1732 = vrot.slane %v1727, %v1731
        %v1750 = vunpack.c.l.b16 %v1711
        %v1751 = vunpack.c.l.b16 %v1712
        %v1752 = vunpack.c.l.b16 %v1713
        %v1753 = vunpack.c.l.b16 %v1714
        %v1754 = vunpack.c.l.b16 %v1715
        %v1755 = vunpack.c.l.b16 %v1716
        %v1756 = vunpack.c.l.b16 %v1717
        %v1757 = vunpack.c.l.b16 %v1718
        %v1758 = vunpack.c.l.b16 %v1719
        %v1759 = vunpack.c.l.b16 %v1720
        %v1760 = vunpack.c.l.b16 %v1721
        %v1761 = vunpack.c.l.b16 %v1722
        %v1762 = vunpack.c.l.b16 %v1723
        %v1763 = vunpack.c.l.b16 %v1724
        %v1764 = vunpack.c.l.b16 %v1725
        %v1765 = vunpack.c.l.b16 %v1726
        %v1766 = vpack.c.b16 %v1751, %v1750
        %v1767 = vpack.c.b16 %v1753, %v1752
        %v1768 = vpack.c.b16 %v1755, %v1754
        %v1769 = vpack.c.b16 %v1757, %v1756
        %v1770 = vpack.c.b16 %v1759, %v1758
        %v1771 = vpack.c.b16 %v1761, %v1760
        %v1772 = vpack.c.b16 %v1763, %v1762
        %v1773 = vpack.c.b16 %v1765, %v1764
        %1782 = vmatprep.subr.bf16.mxu0 0
        %1783 = vmatpush1.bf16.msra.mxu0 %v1766
        %1784 = vmatprep.subr.bf16.mxu0 0
        %1785 = vmatpush1.bf16.msra.mxu0 %v1767
        %1786 = vmatprep.subr.bf16.mxu0 0
        %1787 = vmatpush1.bf16.msra.mxu0 %v1768
        %1788 = vmatprep.subr.bf16.mxu0 0
        %1789 = vmatpush1.bf16.msra.mxu0 %v1769
        %1790 = vmatprep.subr.bf16.mxu0 0
        %1791 = vmatpush1.bf16.msra.mxu0 %v1770
        %1792 = vmatprep.subr.bf16.mxu0 0
        %1793 = vmatpush1.bf16.msra.mxu0 %v1771
        %1794 = vmatprep.subr.bf16.mxu0 0
        %1795 = vmatpush1.bf16.msra.mxu0 %v1772
        %1796 = vmatprep.subr.bf16.mxu0 0
        %1797 = vmatpush1.bf16.msra.mxu0 %v1773
        %1798 = vmatprep.subr.bf16.mxu0 0
        %1799 = vmatpush1.bf16.msra.mxu0 0
        %1800 = vmatprep.subr.bf16.mxu0 0
        %1801 = vmatpush1.bf16.msra.mxu0 0
        %1802 = vmatprep.subr.bf16.mxu0 0
        %1803 = vmatpush1.bf16.msra.mxu0 0
        %1804 = vmatprep.subr.bf16.mxu0 0
        %1805 = vmatpush1.bf16.msra.mxu0 0
        %1806 = vmatprep.subr.bf16.mxu0 0
        %1807 = vmatpush1.bf16.msra.mxu0 0
        %1808 = vmatprep.subr.bf16.mxu0 0
        %1809 = vmatpush1.bf16.msra.mxu0 0
        %1810 = vmatprep.subr.bf16.mxu0 0
        %1811 = vmatpush1.bf16.msra.mxu0 0
        %1812 = vmatprep.subr.bf16.mxu0 0
        %1813 = vmatpush1.bf16.msra.mxu0 0
        %1814 = vmatprep.mubr.bf16.mxu0 0
        %1815 = vmatmul.mubr.bf16.gmra.mrb[0].mxu0 %v1710
        %v1816 = vpop.f32.mrb[0].mxu0
        %v1817 = vadd.f32 %v1732, %v1816
        %v1818 = vpop.f32.mrb[0].mxu0
        %v1819 = vpop.f32.mrb[0].mxu0
        %v1820 = vpop.f32.mrb[0].mxu0
        %1821 = vdwg.mxu0
        %v1822 = vadd.f32 %v1604, %v1817
        %1823 = vst.msk [vmem:[#allocation2] sm:$0xff] %vm842, %v1822
        %p1824 = scmp.eq.s32.totalorder %s38, 1
        // Predicated region
        $region101: #{tpu_custom_call.1} parent=95 // pred_check
          %p1825 = pneg %p1824
        $region102: #{tpu_custom_call.1} parent=95 // pred_check_branch
          %1827 = sbr.rel (%p1825) target = $region104
        $region103: #{tpu_custom_call.1} parent=95 // pred_region
          %v1828 = vld [vmem:[%s4] sm:$0x1]
          %v1829 = vld [vmem:[%s5] sm:$0x1]
          %v1830 = vsel %vm842, %v1822, 0.0
          %1831 = vadd.xlane.f32.xlu0 %v1830
          %v1832 = vpop.xlane.xlu0 %1831
          %v1833 = vmul.f32 %v1832, %v846
          %v1834 = vsub.f32 %v1822, %v1833
          %v1835 = vmul.f32 %v1834, %v1834
          %v1836 = vsel %vm842, %v1835, 0.0
          %1837 = vadd.xlane.f32.xlu0 %v1836
          %v1838 = vpop.xlane.xlu0 %1837
          %v1839 = vmul.f32 %v1838, %v846
          %v1840 = vadd.f32 %v1839, 1e-05
          %v1841 = vrsqrt.pop %v1840
          %v1842 = vmul.f32 %v1834, %v1841
          %v1844 = vlaneseq
          %v1845 = vshrl.u32 %v1844, 7
          %v1846 = vsub.s32 0, %v1845
          %v1847 = vrot.slane %v1828, %v1846
          %v1849 = vmul.f32 %v1842, %v1847
          %v1851 = vlaneseq
          %v1852 = vshrl.u32 %v1851, 7
          %v1853 = vsub.s32 0, %v1852
          %v1854 = vrot.slane %v1829, %v1853
          %v1856 = vadd.f32 %v1849, %v1854
          %v1857 = vld [vmem:[%s6] sm:$0x1]
          %v1859 = vlaneseq
          %v1860 = vshrl.u32 %v1859, 7
          %v1861 = vsub.s32 0, %v1860
          %v1862 = vrot.slane %v1857, %v1861
          %v1864 = vmul.f32 %v1856, %v1862
          %v1865 = vsel %vm842, %v1864, 0.0
          %1866 = vadd.xlane.f32.xlu0 %v1865
          %v1867 = vpop.xlane.xlu0 %1866
          %v1869 = vlaneseq
          %v1870 = vand.u32 %v1869, 127
          %v1871 = vlaneseq
          %v1872 = vshrl.u32 %v1871, 7
          %v1873 = vsub.s32 %v1870, %v1872
          %v1874 = vrot.slane %v1867, %v1873
          %vm1876 = vcmask 57344
          %1877 = vst.msk [vmem:[%s750] sm:$0x1] %vm1876, %v1874
        $region104: #{tpu_custom_call.1} parent=95 // pred_fallthru
          _
        %s1878 = sand.u32 %s517, 1
        %s1879 = scalar_lea.sflag [#allocation5], %s1878
        %s1880 = sand.u32 %s517, 1
        %s1881 = scalar_lea.vmem [#allocation4], %s1880
        // Predicated region
        $region105: #{tpu_custom_call.1} parent=95 // pred_check
          %p1882 = pneg %p527
        $region106: #{tpu_custom_call.1} parent=95 // pred_check_branch
          %1884 = sbr.rel (%p1882) target = $region108
        $region107: #{tpu_custom_call.1} parent=95 // pred_region
          %s1886 = ssub.s32 16, 16
          %1887 = vsyncadd %s1879, %s1886
          %s1888 = smul.addr %s37, 16
          %s1889 = scalar_lea.hbm %s19, %s1888
          %s1891 = sshll.u32 %s1881, 4
          %s1892 = int_to_ptr.vmem [resolvable:$true] %s1891
          %1894 = dma.vmem_to_hbm [thread:$0]  %s1892, 16, %s1889, %s1879
        $region108: #{tpu_custom_call.1} parent=95 // pred_fallthru
          _
      $region96: #{tpu_custom_call.1} parent=5 // pred_fallthru
        _
      %p1895 = scmp.le.s32.totalorder 2, %s28
      // Predicated region
      $region109: #{tpu_custom_call.1} parent=5 // pred_check
        %p1896 = pneg %p1895
      $region110: #{tpu_custom_call.1} parent=5 // pred_check_branch
        %1898 = sbr.rel (%p1896) target = $region112
      $region111: #{tpu_custom_call.1} parent=5 // pred_region
        %s1899 = ssub.s32 %s28, 2
        // Predicated region
        $region113: #{tpu_custom_call.1} parent=111 // pred_check
          %p1900 = pneg %p533
        $region114: #{tpu_custom_call.1} parent=111 // pred_check_branch
          %1902 = sbr.rel (%p1900) target = $region116
        $region115: #{tpu_custom_call.1} parent=111 // pred_region
          %s1903 = sand.u32 %s518, 1
          %s1904 = scalar_lea.sflag [#allocation5], %s1903
          %s1905 = sand.u32 %s518, 1
          %s1906 = scalar_lea.vmem [#allocation4], %s1905
          %1907 = dma.done %s1904, 16
        $region116: #{tpu_custom_call.1} parent=111 // pred_fallthru
          _
      $region112: #{tpu_custom_call.1} parent=5 // pred_fallthru
        _
    $region6: #{tpu_custom_call.1} parent=1 // loop_footer
      %s32 = sadd.s32 1, %s28
    $region7: #{tpu_custom_call.1} parent=1 // loop_footer_branch
      %27 = sbr.rel target = $region3
    $region8: #{tpu_custom_call.1} parent=1 // loop_exit
      _
    %1908 = vsyncpa [#allocation5], 1
    %s1909 = scalar_lea.sflag [#allocation5], 1
    %1910 = vsyncpa %s1909, 1

</llo_original>
